<compile_context>
chip_gen: v7x
topology: tpu7x:2x2x1
jax: 0.10.0
libtpu: 0.0.40
codegen_flags: <defaults>
</compile_context>

<pallas_src>
import jax
import jax.numpy as jnp
from jax.experimental import pallas as pl
from jax.experimental.pallas import tpu as pltpu

MARGIN = 200.0
EPS = 1e-6          # matches F.pairwise_distance default eps
_LANES = 128


def _mgfn_partial_kernel(nor_ref, abn_ref, out_ref,
                         con0_acc, con1_acc, n_acc, a_acc):
    """One (batch-chunk, T-tile) step of the contrastive sum-of-squares.

    nor_ref/abn_ref: (2, bc, tile_t, D) native dtype (axis 0 = batch half)
    out_ref:         (1, bc, 4) f32 per-chunk partials (written on last T step)
    *_acc:           (bc, 128) f32 lane-dense accumulators (VMEM scratch)
    """
    t = pl.program_id(1)
    nt = pl.num_programs(1)

    @pl.when(t == 0)
    def _init():
        con0_acc[...] = jnp.zeros_like(con0_acc)
        con1_acc[...] = jnp.zeros_like(con1_acc)
        n_acc[...] = jnp.zeros_like(n_acc)
        a_acc[...] = jnp.zeros_like(a_acc)

    _, bc, tt, d = nor_ref.shape
    ones = jnp.ones((d, _LANES), dtype=nor_ref.dtype)

    def l1(x):
        # (bc, tt, d) native dtype -> (bc, tt, 128) f32 lane-broadcast L1 norm.
        # abs on the VPU in native dtype; the sum over D (and the upcast) is a
        # single MXU ones-contraction with f32 accumulation.
        return jnp.dot(jnp.abs(x).reshape(bc * tt, d), ones,
                       precision=jax.lax.Precision.HIGHEST,
                       preferred_element_type=jnp.float32,
                       ).reshape(bc, tt, _LANES)

    l1n0 = l1(nor_ref[0])          # batch rows 0 .. half-1
    l1n1 = l1(nor_ref[1])          # batch rows half .. B-1
    l1a0 = l1(abn_ref[0])
    l1a1 = l1(abn_ref[1])

    def ssq(x1, x2):
        # sum_t (x1 - x2 + eps)^2  -> lane-dense (bc, 128) partial (all lanes equal)
        diff = x1 - x2 + EPS
        return jnp.sum(diff * diff, axis=1)

    con0_acc[...] += ssq(l1a0, l1n0)   # pairwise(abn_l1, nor_l1), first half rows
    con1_acc[...] += ssq(l1a1, l1n1)   # same, second half rows
    n_acc[...] += ssq(l1n1, l1n0)      # pairwise(nor_l1[half+i], nor_l1[i])
    a_acc[...] += ssq(l1a1, l1a0)      # pairwise(abn_l1[half+i], abn_l1[i])

    @pl.when(t == nt - 1)
    def _finalize():
        # All 128 lanes hold identical values; emit lane 0 once per chunk.
        out_ref[0, :, 0:1] = con0_acc[:, 0:1]
        out_ref[0, :, 1:2] = con1_acc[:, 0:1]
        out_ref[0, :, 2:3] = n_acc[:, 0:1]
        out_ref[0, :, 3:4] = a_acc[:, 0:1]


def _scoped_vmem_limit_bytes():
    """Per-generation scoped-VMEM request (v5e/v6e: 128 MiB phys, v7x: 64 MiB)."""
    cap = 64 << 20                     # conservative fallback (v7x per-core VMEM)
    try:
        cap = int(pltpu.get_tpu_info().vmem_capacity_bytes)
    except Exception:
        pass
    return int(min(cap // 2, 64 << 20))


def _choose_tile_t(bc, T, D, itemsize, vmem_limit_bytes):
    """Largest T tile (divisor of T, multiple of 8 or == T) whose double-buffered
    native-dtype input blocks + in-kernel f32 intermediates fit the budget."""
    rows = 2 * bc

    def footprint(tt):
        block = rows * tt * D * itemsize                 # one input block (native)
        inputs = 2 * 2 * block                           # 2 tensors x double-buffer
        temps = 2 * block + 10 * rows * tt * _LANES * 4  # abs copies + f32 L1/diffs
        return inputs + temps

    cands = sorted({t for t in range(8, T + 1, 8) if T % t == 0} | {T})
    budget = int(0.6 * vmem_limit_bytes)                 # headroom for accs/consts
    fitting = [t for t in cands if footprint(t) <= budget]
    return max(fitting) if fitting else min(cands)


def mgfn_loss(score_normal, score_abnormal, nlabel, alabel,
              nor_feamagnitude, abn_feamagnitude, *,
              tile_t=None, num_chunks=None):
    B, T, D = nor_feamagnitude.shape
    assert abn_feamagnitude.shape == (B, T, D)
    assert B % 2 == 0, "MGFN contrastive terms split the batch in half"
    half = B // 2

    # Pair-preserving batch chunks along the leading 'parallel' grid axis
    # (2 chunks -> both v7x TensorCores get independent work).
    if num_chunks is None:
        num_chunks = 2 if (half >= 2 and half % 2 == 0) else 1
    assert half % num_chunks == 0
    bc = half // num_chunks

    itemsize = jnp.dtype(nor_feamagnitude.dtype).itemsize
    vmem_limit = _scoped_vmem_limit_bytes()
    if tile_t is None:
        tile_t = _choose_tile_t(bc, T, D, itemsize, vmem_limit)
    assert T % tile_t == 0 and (tile_t == T or tile_t % 8 == 0), (T, tile_t)
    grid = (num_chunks, T // tile_t)

    # Free leading-axis views: row i pairs with row half+i inside every block.
    nor4 = nor_feamagnitude.reshape(2, half, T, D)
    abn4 = abn_feamagnitude.reshape(2, half, T, D)

    cost = pl.CostEstimate(
        flops=2 * B * T * D * (2 * _LANES + 1) + 12 * B * T * _LANES,
        transcendentals=0,
        bytes_accessed=2 * B * T * D * itemsize + num_chunks * bc * 4 * 4,
    )

    parts = pl.pallas_call(
        _mgfn_partial_kernel,
        out_shape=jax.ShapeDtypeStruct((num_chunks, bc, 4), jnp.float32),
        grid_spec=pltpu.PrefetchScalarGridSpec(
            num_scalar_prefetch=0,
            grid=grid,
            in_specs=[
                # NOTE: if a profile shows exposed DMA, bump these two specs to
                # pipeline_mode=pl.Buffered(3) (re-check the VMEM budget first).
                pl.BlockSpec((2, bc, tile_t, D), lambda c, t: (0, c, t, 0)),
                pl.BlockSpec((2, bc, tile_t, D), lambda c, t: (0, c, t, 0)),
            ],
            out_specs=pl.BlockSpec((1, bc, 4), lambda c, t: (c, 0, 0)),
            scratch_shapes=[
                pltpu.VMEM((bc, _LANES), jnp.float32),   # con, first half rows
                pltpu.VMEM((bc, _LANES), jnp.float32),   # con, second half rows
                pltpu.VMEM((bc, _LANES), jnp.float32),   # con_n
                pltpu.VMEM((bc, _LANES), jnp.float32),   # con_a
            ],
        ),
        compiler_params=pltpu.CompilerParams(
            dimension_semantics=("parallel", "arbitrary"),
            vmem_limit_bytes=vmem_limit,
        ),
        cost_estimate=cost,
    )(nor4, abn4)

    parts = parts.reshape(half, 4)           # row i = batch pair (i, half+i)

    # ---- tiny final combine (BCE + sqrt/clamp + weighted sum) in plain JAX ----
    score = jnp.concatenate([jnp.ravel(score_normal),
                             jnp.ravel(score_abnormal)]).astype(jnp.float32)
    label = jnp.concatenate([jnp.ravel(nlabel),
                             jnp.ravel(alabel)]).astype(jnp.float32)
    log_s = jnp.maximum(jnp.log(score), -100.0)          # BCELoss log clamp
    log_1ms = jnp.maximum(jnp.log(1.0 - score), -100.0)
    loss_cls = jnp.mean(-(label * log_s + (1.0 - label) * log_1ms))

    con_ssq = jnp.concatenate([parts[:, 0], parts[:, 1]])        # (B,)
    dist = jnp.sqrt(con_ssq)
    loss_con = jnp.mean(jnp.square(jnp.maximum(MARGIN - dist, 0.0)))   # label = 1
    loss_con_n = jnp.mean(parts[:, 2])                   # label = 0 -> mean(d^2)
    loss_con_a = jnp.mean(parts[:, 3])

    return loss_cls + 0.001 * (0.001 * loss_con + loss_con_a + loss_con_n)


def mgfn_loss_ref(score_normal, score_abnormal, nlabel, alabel, nor_fea, abn_fea):
    """Pure-JAX reference mirroring the PyTorch module (f32 math)."""
    score = jnp.concatenate([jnp.ravel(score_normal),
                             jnp.ravel(score_abnormal)]).astype(jnp.float32)
    label = jnp.concatenate([jnp.ravel(nlabel), jnp.ravel(alabel)]).astype(jnp.float32)
    loss_cls = jnp.mean(-(label * jnp.maximum(jnp.log(score), -100.0)
                          + (1.0 - label) * jnp.maximum(jnp.log(1.0 - score), -100.0)))

    def contrastive(x1, x2, lab):
        d = jnp.sqrt(jnp.sum((x1 - x2 + EPS) ** 2, axis=1, keepdims=True))
        return jnp.mean((1 - lab) * d ** 2
                        + lab * jnp.maximum(MARGIN - d, 0.0) ** 2)

    nor_l1 = jnp.sum(jnp.abs(nor_fea.astype(jnp.float32)), axis=2)
    abn_l1 = jnp.sum(jnp.abs(abn_fea.astype(jnp.float32)), axis=2)
    half = abn_fea.shape[0] // 2
    loss_con = contrastive(abn_l1, nor_l1, 1)
    loss_con_n = contrastive(nor_l1[half:], nor_l1[:half], 0)
    loss_con_a = contrastive(abn_l1[half:], abn_l1[:half], 0)
    return loss_cls + 0.001 * (0.001 * loss_con + loss_con_a + loss_con_n)


if __name__ == "__main__":
    key = jax.random.PRNGKey(0)
    k1, k2, k3, k4 = jax.random.split(key, 4)
    B, T, D = 4, 16, 128

    # Scores are already probabilities (the module's BCELoss has no sigmoid).
    score_normal = jax.nn.sigmoid(jax.random.normal(k1, (B, 1), jnp.float32))
    score_abnormal = jax.nn.sigmoid(jax.random.normal(k2, (B, 1), jnp.float32))
    nlabel = jnp.zeros((B,), jnp.float32)
    alabel = jnp.ones((B,), jnp.float32)
    nor_fea = jnp.abs(jax.random.normal(k3, (B, T, D), jnp.float32)) * 2.0
    abn_fea = jnp.abs(jax.random.normal(k4, (B, T, D), jnp.float32)) * 5.0

    # Default path (auto tile_t / chunking).
    loss = mgfn_loss(score_normal, score_abnormal, nlabel, alabel, nor_fea, abn_fea)
    jax.block_until_ready(loss)

    # T-tiled path (exercises the accumulate-over-grid loop).
    loss_tiled = mgfn_loss(score_normal, score_abnormal, nlabel, alabel,
                           nor_fea, abn_fea, tile_t=8)
    jax.block_until_ready(loss_tiled)

    # Native bf16 feature path (abs in bf16, MXU accumulates in f32).
    loss_bf16 = mgfn_loss(score_normal, score_abnormal, nlabel, alabel,
                          nor_fea.astype(jnp.bfloat16), abn_fea.astype(jnp.bfloat16))
    jax.block_until_ready(loss_bf16)

    ref = mgfn_loss_ref(score_normal, score_abnormal, nlabel, alabel,
                        nor_fea, abn_fea)
    ref_bf16 = mgfn_loss_ref(score_normal, score_abnormal, nlabel, alabel,
                             nor_fea.astype(jnp.bfloat16), abn_fea.astype(jnp.bfloat16))

    assert jnp.allclose(loss, ref, rtol=1e-2, atol=1e-2), (loss, ref)
    assert jnp.allclose(loss_tiled, ref, rtol=1e-2, atol=1e-2), (loss_tiled, ref)
    assert jnp.allclose(loss_bf16, ref_bf16, rtol=2e-2, atol=2e-2), (loss_bf16, ref_bf16)
    print("KERNEL_OK")
</pallas_src>

<mosaic_0001>
module attributes {stable_mosaic.version = 11 : i64} {
  func.func @_mgfn_partial_kernel(%arg0: i32, %arg1: i32, %arg2: memref<2x1x16x128xf32, #tpu.memory_space<vmem>>, %arg3: memref<2x1x16x128xf32, #tpu.memory_space<vmem>>, %arg4: memref<1x1x4xf32, #tpu.memory_space<vmem>>, %arg5: memref<1x128xf32, #tpu.memory_space<vmem>>, %arg6: memref<1x128xf32, #tpu.memory_space<vmem>>, %arg7: memref<1x128xf32, #tpu.memory_space<vmem>>, %arg8: memref<1x128xf32, #tpu.memory_space<vmem>>) attributes {dimension_semantics = [#tpu.dimension_semantics<parallel>, #tpu.dimension_semantics<arbitrary>], iteration_bounds = array<i64: 2, 1>, scalar_prefetch = 0 : i64, scratch_operands = 4 : i64, tpu.core_type = #tpu.core_type<tc>, window_params = [{transform_indices = @transform_0, window_bounds = array<i64: 2, 1, 16, 128>}, {transform_indices = @transform_1, window_bounds = array<i64: 2, 1, 16, 128>}, {transform_indices = @transform_2, window_bounds = array<i64: 1, 1, 4>}]} {
    %c0_i32 = arith.constant 0 : i32
    %0 = arith.cmpi eq, %arg1, %c0_i32 : i32
    %1 = arith.extui %0 : i1 to i32
    %c0_i32_0 = arith.constant 0 : i32
    %2 = arith.cmpi ne, %1, %c0_i32_0 : i32
    scf.if %2 {
      %cst_45 = arith.constant 0.000000e+00 : f32
      %63 = vector.broadcast %cst_45 : f32 to vector<1x128xf32>
      %c0_46 = arith.constant 0 : index
      %c0_47 = arith.constant 0 : index
      %64 = vector.load %arg5[%c0_46, %c0_47] : memref<1x128xf32, #tpu.memory_space<vmem>>, vector<1x128xf32>
      tpu.vector_store %arg5[%c0_46, %c0_47], %63 {strides = array<i32>} : memref<1x128xf32, #tpu.memory_space<vmem>>, vector<1x128xf32>,
      %cst_48 = arith.constant 0.000000e+00 : f32
      %65 = vector.broadcast %cst_48 : f32 to vector<1x128xf32>
      %c0_49 = arith.constant 0 : index
      %c0_50 = arith.constant 0 : index
      %66 = vector.load %arg6[%c0_49, %c0_50] : memref<1x128xf32, #tpu.memory_space<vmem>>, vector<1x128xf32>
      tpu.vector_store %arg6[%c0_49, %c0_50], %65 {strides = array<i32>} : memref<1x128xf32, #tpu.memory_space<vmem>>, vector<1x128xf32>,
      %cst_51 = arith.constant 0.000000e+00 : f32
      %67 = vector.broadcast %cst_51 : f32 to vector<1x128xf32>
      %c0_52 = arith.constant 0 : index
      %c0_53 = arith.constant 0 : index
      %68 = vector.load %arg7[%c0_52, %c0_53] : memref<1x128xf32, #tpu.memory_space<vmem>>, vector<1x128xf32>
      tpu.vector_store %arg7[%c0_52, %c0_53], %67 {strides = array<i32>} : memref<1x128xf32, #tpu.memory_space<vmem>>, vector<1x128xf32>,
      %cst_54 = arith.constant 0.000000e+00 : f32
      %69 = vector.broadcast %cst_54 : f32 to vector<1x128xf32>
      %c0_55 = arith.constant 0 : index
      %c0_56 = arith.constant 0 : index
      %70 = vector.load %arg8[%c0_55, %c0_56] : memref<1x128xf32, #tpu.memory_space<vmem>>, vector<1x128xf32>
      tpu.vector_store %arg8[%c0_55, %c0_56], %69 {strides = array<i32>} : memref<1x128xf32, #tpu.memory_space<vmem>>, vector<1x128xf32>,
    } else {
    }
    %cst = arith.constant 1.000000e+00 : f32
    %3 = vector.broadcast %cst : f32 to vector<128x128xf32>
    %c0 = arith.constant 0 : index
    %c0_1 = arith.constant 0 : index
    %c0_2 = arith.constant 0 : index
    %c0_3 = arith.constant 0 : index
    %4 = vector.load %arg2[%c0, %c0_1, %c0_2, %c0_3] : memref<2x1x16x128xf32, #tpu.memory_space<vmem>>, vector<1x1x16x128xf32>
    %5 = vector.shape_cast %4 : vector<1x1x16x128xf32> to vector<1x16x128xf32>
    %6 = math.absf %5 : vector<1x16x128xf32>
    %7 = vector.shape_cast %6 : vector<1x16x128xf32> to vector<16x128xf32>
    %cst_4 = arith.constant dense<0.000000e+00> : vector<16x128xf32>
    %8 = tpu.matmul %7, %3, %cst_4 {dimension_numbers = #tpu.dot_dimension_numbers<[1], [0], [0], [1], [0, 0, 1, 1], [], []>, precision = #tpu.contract_precision<fp32>} : vector<16x128xf32>, vector<128x128xf32>, vector<16x128xf32> -> vector<16x128xf32>
    %9 = vector.shape_cast %8 : vector<16x128xf32> to vector<1x16x128xf32>
    %c1 = arith.constant 1 : index
    %c0_5 = arith.constant 0 : index
    %c0_6 = arith.constant 0 : index
    %c0_7 = arith.constant 0 : index
    %10 = vector.load %arg2[%c1, %c0_5, %c0_6, %c0_7] : memref<2x1x16x128xf32, #tpu.memory_space<vmem>>, vector<1x1x16x128xf32>
    %11 = vector.shape_cast %10 : vector<1x1x16x128xf32> to vector<1x16x128xf32>
    %12 = math.absf %11 : vector<1x16x128xf32>
    %13 = vector.shape_cast %12 : vector<1x16x128xf32> to vector<16x128xf32>
    %cst_8 = arith.constant dense<0.000000e+00> : vector<16x128xf32>
    %14 = tpu.matmul %13, %3, %cst_8 {dimension_numbers = #tpu.dot_dimension_numbers<[1], [0], [0], [1], [0, 0, 1, 1], [], []>, precision = #tpu.contract_precision<fp32>} : vector<16x128xf32>, vector<128x128xf32>, vector<16x128xf32> -> vector<16x128xf32>
    %15 = vector.shape_cast %14 : vector<16x128xf32> to vector<1x16x128xf32>
    %c0_9 = arith.constant 0 : index
    %c0_10 = arith.constant 0 : index
    %c0_11 = arith.constant 0 : index
    %c0_12 = arith.constant 0 : index
    %16 = vector.load %arg3[%c0_9, %c0_10, %c0_11, %c0_12] : memref<2x1x16x128xf32, #tpu.memory_space<vmem>>, vector<1x1x16x128xf32>
    %17 = vector.shape_cast %16 : vector<1x1x16x128xf32> to vector<1x16x128xf32>
    %18 = math.absf %17 : vector<1x16x128xf32>
    %19 = vector.shape_cast %18 : vector<1x16x128xf32> to vector<16x128xf32>
    %cst_13 = arith.constant dense<0.000000e+00> : vector<16x128xf32>
    %20 = tpu.matmul %19, %3, %cst_13 {dimension_numbers = #tpu.dot_dimension_numbers<[1], [0], [0], [1], [0, 0, 1, 1], [], []>, precision = #tpu.contract_precision<fp32>} : vector<16x128xf32>, vector<128x128xf32>, vector<16x128xf32> -> vector<16x128xf32>
    %21 = vector.shape_cast %20 : vector<16x128xf32> to vector<1x16x128xf32>
    %c1_14 = arith.constant 1 : index
    %c0_15 = arith.constant 0 : index
    %c0_16 = arith.constant 0 : index
    %c0_17 = arith.constant 0 : index
    %22 = vector.load %arg3[%c1_14, %c0_15, %c0_16, %c0_17] : memref<2x1x16x128xf32, #tpu.memory_space<vmem>>, vector<1x1x16x128xf32>
    %23 = vector.shape_cast %22 : vector<1x1x16x128xf32> to vector<1x16x128xf32>
    %24 = math.absf %23 : vector<1x16x128xf32>
    %25 = vector.shape_cast %24 : vector<1x16x128xf32> to vector<16x128xf32>
    %cst_18 = arith.constant dense<0.000000e+00> : vector<16x128xf32>
    %26 = tpu.matmul %25, %3, %cst_18 {dimension_numbers = #tpu.dot_dimension_numbers<[1], [0], [0], [1], [0, 0, 1, 1], [], []>, precision = #tpu.contract_precision<fp32>} : vector<16x128xf32>, vector<128x128xf32>, vector<16x128xf32> -> vector<16x128xf32>
    %27 = vector.shape_cast %26 : vector<16x128xf32> to vector<1x16x128xf32>
    %c0_19 = arith.constant 0 : index
    %c0_20 = arith.constant 0 : index
    %28 = vector.load %arg5[%c0_19, %c0_20] : memref<1x128xf32, #tpu.memory_space<vmem>>, vector<1x128xf32>
    %29 = arith.subf %21, %9 : vector<1x16x128xf32>
    %cst_21 = arith.constant 9.99999997E-7 : f32
    %30 = vector.broadcast %cst_21 : f32 to vector<1x16x128xf32>
    %31 = arith.addf %29, %30 : vector<1x16x128xf32>
    %32 = arith.mulf %31, %31 : vector<1x16x128xf32>
    %cst_22 = arith.constant dense<0.000000e+00> : vector<1x128xf32>
    %33 = vector.multi_reduction <add>, %32, %cst_22 [1] : vector<1x16x128xf32> to vector<1x128xf32>
    %34 = arith.addf %28, %33 : vector<1x128xf32>
    %c0_23 = arith.constant 0 : index
    %c0_24 = arith.constant 0 : index
    %35 = vector.load %arg5[%c0_23, %c0_24] : memref<1x128xf32, #tpu.memory_space<vmem>>, vector<1x128xf32>
    tpu.vector_store %arg5[%c0_23, %c0_24], %34 {strides = array<i32>} : memref<1x128xf32, #tpu.memory_space<vmem>>, vector<1x128xf32>,
    %c0_25 = arith.constant 0 : index
    %c0_26 = arith.constant 0 : index
    %36 = vector.load %arg6[%c0_25, %c0_26] : memref<1x128xf32, #tpu.memory_space<vmem>>, vector<1x128xf32>
    %37 = arith.subf %27, %15 : vector<1x16x128xf32>
    %cst_27 = arith.constant 9.99999997E-7 : f32
    %38 = vector.broadcast %cst_27 : f32 to vector<1x16x128xf32>
    %39 = arith.addf %37, %38 : vector<1x16x128xf32>
    %40 = arith.mulf %39, %39 : vector<1x16x128xf32>
    %cst_28 = arith.constant dense<0.000000e+00> : vector<1x128xf32>
    %41 = vector.multi_reduction <add>, %40, %cst_28 [1] : vector<1x16x128xf32> to vector<1x128xf32>
    %42 = arith.addf %36, %41 : vector<1x128xf32>
    %c0_29 = arith.constant 0 : index
    %c0_30 = arith.constant 0 : index
    %43 = vector.load %arg6[%c0_29, %c0_30] : memref<1x128xf32, #tpu.memory_space<vmem>>, vector<1x128xf32>
    tpu.vector_store %arg6[%c0_29, %c0_30], %42 {strides = array<i32>} : memref<1x128xf32, #tpu.memory_space<vmem>>, vector<1x128xf32>,
    %c0_31 = arith.constant 0 : index
    %c0_32 = arith.constant 0 : index
    %44 = vector.load %arg7[%c0_31, %c0_32] : memref<1x128xf32, #tpu.memory_space<vmem>>, vector<1x128xf32>
    %45 = arith.subf %15, %9 : vector<1x16x128xf32>
    %cst_33 = arith.constant 9.99999997E-7 : f32
    %46 = vector.broadcast %cst_33 : f32 to vector<1x16x128xf32>
    %47 = arith.addf %45, %46 : vector<1x16x128xf32>
    %48 = arith.mulf %47, %47 : vector<1x16x128xf32>
    %cst_34 = arith.constant dense<0.000000e+00> : vector<1x128xf32>
    %49 = vector.multi_reduction <add>, %48, %cst_34 [1] : vector<1x16x128xf32> to vector<1x128xf32>
    %50 = arith.addf %44, %49 : vector<1x128xf32>
    %c0_35 = arith.constant 0 : index
    %c0_36 = arith.constant 0 : index
    %51 = vector.load %arg7[%c0_35, %c0_36] : memref<1x128xf32, #tpu.memory_space<vmem>>, vector<1x128xf32>
    tpu.vector_store %arg7[%c0_35, %c0_36], %50 {strides = array<i32>} : memref<1x128xf32, #tpu.memory_space<vmem>>, vector<1x128xf32>,
    %c0_37 = arith.constant 0 : index
    %c0_38 = arith.constant 0 : index
    %52 = vector.load %arg8[%c0_37, %c0_38] : memref<1x128xf32, #tpu.memory_space<vmem>>, vector<1x128xf32>
    %53 = arith.subf %27, %21 : vector<1x16x128xf32>
    %cst_39 = arith.constant 9.99999997E-7 : f32
    %54 = vector.broadcast %cst_39 : f32 to vector<1x16x128xf32>
    %55 = arith.addf %53, %54 : vector<1x16x128xf32>
    %56 = arith.mulf %55, %55 : vector<1x16x128xf32>
    %cst_40 = arith.constant dense<0.000000e+00> : vector<1x128xf32>
    %57 = vector.multi_reduction <add>, %56, %cst_40 [1] : vector<1x16x128xf32> to vector<1x128xf32>
    %58 = arith.addf %52, %57 : vector<1x128xf32>
    %c0_41 = arith.constant 0 : index
    %c0_42 = arith.constant 0 : index
    %59 = vector.load %arg8[%c0_41, %c0_42] : memref<1x128xf32, #tpu.memory_space<vmem>>, vector<1x128xf32>
    tpu.vector_store %arg8[%c0_41, %c0_42], %58 {strides = array<i32>} : memref<1x128xf32, #tpu.memory_space<vmem>>, vector<1x128xf32>,
    %c0_i32_43 = arith.constant 0 : i32
    %60 = arith.cmpi eq, %arg1, %c0_i32_43 : i32
    %61 = arith.extui %60 : i1 to i32
    %c0_i32_44 = arith.constant 0 : i32
    %62 = arith.cmpi ne, %61, %c0_i32_44 : i32
    scf.if %62 {
      %c0_45 = arith.constant 0 : index
      %c0_46 = arith.constant 0 : index
      %63 = vector.load %arg5[%c0_45, %c0_46] : memref<1x128xf32, #tpu.memory_space<vmem>>, vector<1x1xf32>
      %c0_47 = arith.constant 0 : index
      %c0_48 = arith.constant 0 : index
      %c0_49 = arith.constant 0 : index
      %64 = vector.load %arg4[%c0_47, %c0_48, %c0_49] : memref<1x1x4xf32, #tpu.memory_space<vmem>>, vector<1x1x1xf32>
      %65 = vector.shape_cast %64 : vector<1x1x1xf32> to vector<1x1xf32>
      %66 = vector.shape_cast %63 : vector<1x1xf32> to vector<1x1x1xf32>
      tpu.vector_store %arg4[%c0_47, %c0_48, %c0_49], %66 {strides = array<i32>} : memref<1x1x4xf32, #tpu.memory_space<vmem>>, vector<1x1x1xf32>,
      %c0_50 = arith.constant 0 : index
      %c0_51 = arith.constant 0 : index
      %67 = vector.load %arg6[%c0_50, %c0_51] : memref<1x128xf32, #tpu.memory_space<vmem>>, vector<1x1xf32>
      %c0_52 = arith.constant 0 : index
      %c0_53 = arith.constant 0 : index
      %c1_54 = arith.constant 1 : index
      %68 = vector.load %arg4[%c0_52, %c0_53, %c1_54] : memref<1x1x4xf32, #tpu.memory_space<vmem>>, vector<1x1x1xf32>
      %69 = vector.shape_cast %68 : vector<1x1x1xf32> to vector<1x1xf32>
      %70 = vector.shape_cast %67 : vector<1x1xf32> to vector<1x1x1xf32>
      tpu.vector_store %arg4[%c0_52, %c0_53, %c1_54], %70 {strides = array<i32>} : memref<1x1x4xf32, #tpu.memory_space<vmem>>, vector<1x1x1xf32>,
      %c0_55 = arith.constant 0 : index
      %c0_56 = arith.constant 0 : index
      %71 = vector.load %arg7[%c0_55, %c0_56] : memref<1x128xf32, #tpu.memory_space<vmem>>, vector<1x1xf32>
      %c0_57 = arith.constant 0 : index
      %c0_58 = arith.constant 0 : index
      %c2 = arith.constant 2 : index
      %72 = vector.load %arg4[%c0_57, %c0_58, %c2] : memref<1x1x4xf32, #tpu.memory_space<vmem>>, vector<1x1x1xf32>
      %73 = vector.shape_cast %72 : vector<1x1x1xf32> to vector<1x1xf32>
      %74 = vector.shape_cast %71 : vector<1x1xf32> to vector<1x1x1xf32>
      tpu.vector_store %arg4[%c0_57, %c0_58, %c2], %74 {strides = array<i32>} : memref<1x1x4xf32, #tpu.memory_space<vmem>>, vector<1x1x1xf32>,
      %c0_59 = arith.constant 0 : index
      %c0_60 = arith.constant 0 : index
      %75 = vector.load %arg8[%c0_59, %c0_60] : memref<1x128xf32, #tpu.memory_space<vmem>>, vector<1x1xf32>
      %c0_61 = arith.constant 0 : index
      %c0_62 = arith.constant 0 : index
      %c3 = arith.constant 3 : index
      %76 = vector.load %arg4[%c0_61, %c0_62, %c3] : memref<1x1x4xf32, #tpu.memory_space<vmem>>, vector<1x1x1xf32>
      %77 = vector.shape_cast %76 : vector<1x1x1xf32> to vector<1x1xf32>
      %78 = vector.shape_cast %75 : vector<1x1xf32> to vector<1x1x1xf32>
      tpu.vector_store %arg4[%c0_61, %c0_62, %c3], %78 {strides = array<i32>} : memref<1x1x4xf32, #tpu.memory_space<vmem>>, vector<1x1x1xf32>,
    } else {
    }
    return
  }
  func.func @transform_0(%arg0: i32, %arg1: i32) -> (i32, i32, i32, i32) {
    %c0_i32 = arith.constant 0 : i32
    %c0_i32_0 = arith.constant 0 : i32
    %c0_i32_1 = arith.constant 0 : i32
    return %c0_i32, %arg0, %arg1, %c0_i32_0 : i32, i32, i32, i32
  }
  func.func @transform_1(%arg0: i32, %arg1: i32) -> (i32, i32, i32, i32) {
    %c0_i32 = arith.constant 0 : i32
    %c0_i32_0 = arith.constant 0 : i32
    %c0_i32_1 = arith.constant 0 : i32
    return %c0_i32, %arg0, %arg1, %c0_i32_0 : i32, i32, i32, i32
  }
  func.func @transform_2(%arg0: i32, %arg1: i32) -> (i32, i32, i32) {
    %c0_i32 = arith.constant 0 : i32
    %c0_i32_0 = arith.constant 0 : i32
    %c0_i32_1 = arith.constant 0 : i32
    return %arg0, %c0_i32, %c0_i32_0 : i32, i32, i32
  }
}

</mosaic_0001>

<llo_original>
// kernel: tpu_custom_call.1
$region0: #{tpu_custom_call.1}
  #allocation0 [shape = 'u32[]', space=smem, size = 0x4, offset = 0x4, fixed_abs, tag = 'smem constant byte address 0x4 - core index']
  #allocation1 [shape = 'u32[144,128]{1,0:T(1,128)}', space=vmem, size = 0x12000, scoped, tag = 'internal scratch']
  #allocation2 [shape = 'f32[1,128]{1,0:T(1,128)}', space=vmem, size = 0x200, scoped, tag = 'scratch operand']
  #allocation3 [shape = 'f32[1,128]{1,0:T(1,128)}', space=vmem, size = 0x200, scoped, tag = 'scratch operand']
  #allocation4 [shape = 'f32[1,128]{1,0:T(1,128)}', space=vmem, size = 0x200, scoped, tag = 'scratch operand']
  #allocation5 [shape = 'f32[1,128]{1,0:T(1,128)}', space=vmem, size = 0x200, scoped, tag = 'scratch operand']
  #allocation12 [shape = 's32[]', space=sflag, size = 0x4, offset = 0, fixed_abs, tag = 'sflag constant byte address 0x0 - dummy sync flag']
  #allocation14 [shape = 's32[]', space=sflag, size = 0x4, offset = 0, fixed_abs, tag = 'sflag constant byte address 0x0 - dummy sync flag']
  %s0 = inlined_call_operand.hbm [shape: f32[2,2,16,128], index: 0, kind: input, shape index: {}]
  %s1 = inlined_call_operand.hbm [shape: f32[2,2,16,128], index: 1, kind: input, shape index: {}]
  %s2 = inlined_call_operand.hbm [shape: f32[2,1,4], index: 2, kind: output, shape index: {}]
  %s3 = sld [smem:[#allocation0]]
  $region57: #{tpu_custom_call.1} parent=0
    _
  %s5 = ssub.s32 1, %s3
  %s6 = scalar_select 0, %s5, %s3
  $region1: #{tpu_custom_call.1} parent=0
    #allocation6 [shape = 'u8[32768]{0}', space=vmem, size = 0x8000, scoped, tag = 'input window, operand 0']
    #allocation7 [shape = 's32[2]{0}', space=sflag, size = 0x8, scoped, tag = 'scoped memory for tpu_custom_call.1']
    #allocation8 [shape = 's32[2]{0}', space=sflag, size = 0x8, scoped, tag = 'scoped memory for tpu_custom_call.1']
    #allocation9 [shape = 'u8[32768]{0}', space=vmem, size = 0x8000, scoped, tag = 'input window, operand 1']
    #allocation10 [shape = 's32[2]{0}', space=sflag, size = 0x8, scoped, tag = 'scoped memory for tpu_custom_call.1']
    #allocation11 [shape = 'u8[1024]{0}', space=vmem, size = 0x400, scoped, tag = 'output window, operand 0']
    %7 = vsyncpa [#allocation7], 0
    %s8 = scalar_lea.sflag [#allocation7], 1
    %9 = vsyncpa %s8, 0
    %10 = vsyncpa [#allocation10], 0
    %s11 = scalar_lea.sflag [#allocation10], 1
    %12 = vsyncpa %s11, 0
    %13 = vsyncpa [#allocation8], 0
    %s14 = scalar_lea.sflag [#allocation8], 1
    %15 = vsyncpa %s14, 0
    loop: start=0, step=1, limit=4
    $region2: #{tpu_custom_call.1} parent=1 // loop_pre_header
      _
    $region3: #{tpu_custom_call.1} parent=1 // loop_header
      %s17 = sphi 0, %s21
      %p18 = scmp.ge.s32.totalorder %s17, 4
      %s24 = sphi 0, %s36
      %s25 = sphi 0, %s32
      %s26 = sphi 0, %s24
      %s27 = sphi 0, %s25
      %s28 = sphi 0, %s26
      %s29 = sphi 0, %s27
      %s41 = sphi 0, %s43
      %s44 = sphi 0, %s41
      %s45 = sphi 0, %s44
      %s61 = sphi 0, %s45
      %s69 = sphi 0, %s71
      %s72 = sphi 0, %s69
      %s73 = sphi 0, %s72
      %s89 = sphi 0, %s73
      %s95 = sphi 0, %s97
      %s98 = sphi 0, %s95
      %s99 = sphi 0, %s98
      %s115 = sphi 0, %s99
    $region4: #{tpu_custom_call.1} parent=1 // loop_header_branch
      %20 = sbr.rel (%p18) target = $region8
    $region5: #{tpu_custom_call.1} parent=1 // loop_body
      %s22 = ssub.s32 %s17, 1
      %s23 = ssub.s32 %s17, 2
      %s30 = sadd.s32 1, %s25
      %p31 = scmp.ge.s32.totalorder %s30, 1
      %s32 = scalar_select %p31, 0, %s30
      %s33 = sadd.s32 1, %s24
      %s34 = scalar_select %p31, %s33, %s24
      %p35 = scmp.ge.s32.totalorder %s34, 2
      %s36 = scalar_select %p35, 0, %s34
      %s37 = ssub.s32 %s24, %s36
      %s38 = ssub.s32 %s25, %s32
      %s39 = sor.u32 %s37, %s38
      %p40 = scmp.eq.s32.totalorder %s39, 0
      %s42 = sadd.s32 %s41, 1
      %s43 = scalar_select %p40, %s41, %s42
      %p46 = pneg %p40
      %p47 = scmp.eq.s32.totalorder %s17, 1
      %p48 = por %p46, %p47
      %p49 = scmp.ne.s32.totalorder %s41, %s44
      %p50 = scmp.eq.s32.totalorder %s17, 0
      %p51 = por %p49, %p50
      %p52 = scmp.ne.s32.totalorder %s41, %s44
      %p53 = scmp.eq.s32.totalorder %s22, 1
      %p54 = por %p52, %p53
      %p55 = scmp.ne.s32.totalorder %s44, %s45
      %p56 = scmp.eq.s32.totalorder %s22, 0
      %p57 = por %p55, %p56
      %p58 = scmp.ne.s32.totalorder %s44, %s45
      %p59 = scmp.eq.s32.totalorder %s23, 1
      %p60 = por %p58, %p59
      %p62 = scmp.ne.s32.totalorder %s45, %s61
      %p63 = scmp.eq.s32.totalorder %s23, 0
      %p64 = por %p62, %p63
      %s65 = ssub.s32 %s24, %s36
      %s66 = ssub.s32 %s25, %s32
      %s67 = sor.u32 %s65, %s66
      %p68 = scmp.eq.s32.totalorder %s67, 0
      %s70 = sadd.s32 %s69, 1
      %s71 = scalar_select %p68, %s69, %s70
      %p74 = pneg %p68
      %p75 = scmp.eq.s32.totalorder %s17, 1
      %p76 = por %p74, %p75
      %p77 = scmp.ne.s32.totalorder %s69, %s72
      %p78 = scmp.eq.s32.totalorder %s17, 0
      %p79 = por %p77, %p78
      %p80 = scmp.ne.s32.totalorder %s69, %s72
      %p81 = scmp.eq.s32.totalorder %s22, 1
      %p82 = por %p80, %p81
      %p83 = scmp.ne.s32.totalorder %s72, %s73
      %p84 = scmp.eq.s32.totalorder %s22, 0
      %p85 = por %p83, %p84
      %p86 = scmp.ne.s32.totalorder %s72, %s73
      %p87 = scmp.eq.s32.totalorder %s23, 1
      %p88 = por %p86, %p87
      %p90 = scmp.ne.s32.totalorder %s73, %s89
      %p91 = scmp.eq.s32.totalorder %s23, 0
      %p92 = por %p90, %p91
      %s93 = ssub.s32 %s24, %s36
      %p94 = scmp.eq.s32.totalorder %s93, 0
      %s96 = sadd.s32 %s95, 1
      %s97 = scalar_select %p94, %s95, %s96
      %p100 = pneg %p94
      %p101 = scmp.eq.s32.totalorder %s17, 1
      %p102 = por %p100, %p101
      %p103 = scmp.ne.s32.totalorder %s95, %s98
      %p104 = scmp.eq.s32.totalorder %s17, 0
      %p105 = por %p103, %p104
      %p106 = scmp.ne.s32.totalorder %s95, %s98
      %p107 = scmp.eq.s32.totalorder %s22, 1
      %p108 = por %p106, %p107
      %p109 = scmp.ne.s32.totalorder %s98, %s99
      %p110 = scmp.eq.s32.totalorder %s22, 0
      %p111 = por %p109, %p110
      %p112 = scmp.ne.s32.totalorder %s98, %s99
      %p113 = scmp.eq.s32.totalorder %s23, 1
      %p114 = por %p112, %p113
      %p116 = scmp.ne.s32.totalorder %s99, %s115
      %p117 = scmp.eq.s32.totalorder %s23, 0
      %p118 = por %p116, %p117
      %p119 = scmp.le.s32.totalorder 1, %s17
      %p120 = scmp.lt.s32.totalorder %s17, 3
      %p121 = pnand %p119, %p120
      %p122 = pneg %p121
      // Predicated region
      $region9: #{tpu_custom_call.1} parent=5 // pred_check
        _
      $region10: #{tpu_custom_call.1} parent=5 // pred_check_branch
        %124 = sbr.rel (%p121) target = $region12
      $region11: #{tpu_custom_call.1} parent=5 // pred_region
        %s125 = ssub.s32 %s17, 1
      $region12: #{tpu_custom_call.1} parent=5 // pred_fallthru
        _
      %p126 = scmp.lt.s32.totalorder %s17, 2
      // Predicated region
      $region13: #{tpu_custom_call.1} parent=5 // pred_check
        %p127 = pneg %p126
      $region14: #{tpu_custom_call.1} parent=5 // pred_check_branch
        %129 = sbr.rel (%p127) target = $region16
      $region15: #{tpu_custom_call.1} parent=5 // pred_region
        // Predicated region
        $region17: #{tpu_custom_call.1} parent=15 // pred_check
          %p130 = pneg %p51
        $region18: #{tpu_custom_call.1} parent=15 // pred_check_branch
          %132 = sbr.rel (%p130) target = $region20
        $region19: #{tpu_custom_call.1} parent=15 // pred_region
          #allocation13 [shape = 'u32[6]{0}', space=smem, size = 0x18, scoped, tag = 'DMA stride descriptor']
          %s133 = sand.u32 %s41, 1
          %s134 = scalar_lea.sflag [#allocation7], %s133
          %s135 = sand.u32 %s41, 1
          %s136 = smul.addr %s135, 32
          %s137 = scalar_lea.vmem [#allocation6], %s136
          %s138 = smul.u32 2, %s25
          %s140 = ssub.s32 512, 512
          %141 = vsyncadd %s134, %s140
          %s142 = smul.addr %s24, 2
          %s143 = sadd.s32 %s138, %s142
          %s144 = smul.addr %s143, 128
          %s145 = scalar_lea.hbm %s0, %s144
          %s147 = sshll.u32 1, 14
          %s148 = sxor.u32 4294967295, %s147
          %s150 = sld [smem:[#allocation0]]
          %s151 = sadd.s32 2, %s150
          %s153 = sshll.u32 7, 26
          %s154 = sxor.u32 4294967295, %s153
          %s155 = sand.u32 0, %s154
          %s156 = sshll.u32 %s151, 26
          %s157 = sor.u32 %s155, %s156
          %s158 = sshll.u32 %s137, 4
          %s159 = int_to_ptr.vmem [resolvable:$true] %s158
          %165 = sst [smem:[#allocation13]] 512
          %s166 = scalar_lea.smem [#allocation13], 1
          %167 = sst [smem:[%s166]] 256
          %s168 = scalar_lea.smem [#allocation13], 2
          %169 = sst [smem:[%s168]] 2
          %s170 = scalar_lea.smem [#allocation13], 3
          %171 = sst [smem:[%s170]] 128
          %s172 = scalar_lea.smem [#allocation13], 4
          %173 = sst [smem:[%s172]] 128
          %s174 = scalar_lea.smem [#allocation13], 5
          %175 = sst [smem:[%s174]] 8
          %177 = dma.general %s145, 512, %s159, %s134, [#allocation12], [#allocation13], %s157, 0
        $region20: #{tpu_custom_call.1} parent=15 // pred_fallthru
          _
        // Predicated region
        $region21: #{tpu_custom_call.1} parent=15 // pred_check
          %p178 = pneg %p79
        $region22: #{tpu_custom_call.1} parent=15 // pred_check_branch
          %180 = sbr.rel (%p178) target = $region24
        $region23: #{tpu_custom_call.1} parent=15 // pred_region
          #allocation15 [shape = 'u32[6]{0}', space=smem, size = 0x18, scoped, tag = 'DMA stride descriptor']
          %s181 = sand.u32 %s69, 1
          %s182 = scalar_lea.sflag [#allocation10], %s181
          %s183 = sand.u32 %s69, 1
          %s184 = smul.addr %s183, 32
          %s185 = scalar_lea.vmem [#allocation9], %s184
          %s186 = smul.u32 2, %s25
          %s188 = ssub.s32 512, 512
          %189 = vsyncadd %s182, %s188
          %s190 = smul.addr %s24, 2
          %s191 = sadd.s32 %s186, %s190
          %s192 = smul.addr %s191, 128
          %s193 = scalar_lea.hbm %s1, %s192
          %s195 = sshll.u32 1, 14
          %s196 = sxor.u32 4294967295, %s195
          %s198 = sld [smem:[#allocation0]]
          %s199 = sadd.s32 2, %s198
          %s201 = sshll.u32 7, 26
          %s202 = sxor.u32 4294967295, %s201
          %s203 = sand.u32 0, %s202
          %s204 = sshll.u32 %s199, 26
          %s205 = sor.u32 %s203, %s204
          %s206 = sshll.u32 %s185, 4
          %s207 = int_to_ptr.vmem [resolvable:$true] %s206
          %213 = sst [smem:[#allocation15]] 512
          %s214 = scalar_lea.smem [#allocation15], 1
          %215 = sst [smem:[%s214]] 256
          %s216 = scalar_lea.smem [#allocation15], 2
          %217 = sst [smem:[%s216]] 2
          %s218 = scalar_lea.smem [#allocation15], 3
          %219 = sst [smem:[%s218]] 128
          %s220 = scalar_lea.smem [#allocation15], 4
          %221 = sst [smem:[%s220]] 128
          %s222 = scalar_lea.smem [#allocation15], 5
          %223 = sst [smem:[%s222]] 8
          %225 = dma.general %s193, 512, %s207, %s182, [#allocation14], [#allocation15], %s205, 0
        $region24: #{tpu_custom_call.1} parent=15 // pred_fallthru
          _
      $region16: #{tpu_custom_call.1} parent=5 // pred_fallthru
        _
      %p226 = scmp.le.s32.totalorder 1, %s17
      %p227 = scmp.lt.s32.totalorder %s17, 3
      %p228 = pnand %p226, %p227
      %p229 = pneg %p228
      // Predicated region
      $region25: #{tpu_custom_call.1} parent=5 // pred_check
        _
      $region26: #{tpu_custom_call.1} parent=5 // pred_check_branch
        %231 = sbr.rel (%p228) target = $region28
      $region27: #{tpu_custom_call.1} parent=5 // pred_region
        %s232 = ssub.s32 %s17, 1
        %s233 = sand.u32 %s44, 1
        %s234 = scalar_lea.sflag [#allocation7], %s233
        %s235 = sand.u32 %s44, 1
        %s236 = smul.addr %s235, 32
        %s237 = scalar_lea.vmem [#allocation6], %s236
        // Predicated region
        $region29: #{tpu_custom_call.1} parent=27 // pred_check
          %p238 = pneg %p57
        $region30: #{tpu_custom_call.1} parent=27 // pred_check_branch
          %240 = sbr.rel (%p238) target = $region32
        $region31: #{tpu_custom_call.1} parent=27 // pred_region
          %241 = dma.done %s234, 512
        $region32: #{tpu_custom_call.1} parent=27 // pred_fallthru
          _
        %s242 = sand.u32 %s72, 1
        %s243 = scalar_lea.sflag [#allocation10], %s242
        %s244 = sand.u32 %s72, 1
        %s245 = smul.addr %s244, 32
        %s246 = scalar_lea.vmem [#allocation9], %s245
        // Predicated region
        $region33: #{tpu_custom_call.1} parent=27 // pred_check
          %p247 = pneg %p85
        $region34: #{tpu_custom_call.1} parent=27 // pred_check_branch
          %249 = sbr.rel (%p247) target = $region36
        $region35: #{tpu_custom_call.1} parent=27 // pred_region
          %250 = dma.done %s243, 512
        $region36: #{tpu_custom_call.1} parent=27 // pred_fallthru
          _
        %s251 = sand.u32 %s44, 1
        %s252 = scalar_lea.sflag [#allocation7], %s251
        %s253 = sand.u32 %s44, 1
        %s254 = smul.addr %s253, 32
        %s255 = scalar_lea.vmem [#allocation6], %s254
        %p256 = pneg %p57
        %p257 = pneg %p54
        %s258 = sand.u32 %s72, 1
        %s259 = scalar_lea.sflag [#allocation10], %s258
        %s260 = sand.u32 %s72, 1
        %s261 = smul.addr %s260, 32
        %s262 = scalar_lea.vmem [#allocation9], %s261
        %p263 = pneg %p85
        %p264 = pneg %p82
        %p265 = pneg %p111
        %p266 = pneg %p108
        %s267 = sand.u32 %s98, 1
        %s268 = scalar_lea.sflag [#allocation8], %s267
        %s269 = sand.u32 %s98, 1
        %s270 = scalar_lea.vmem [#allocation11], %s269
        %s271 = smul.u32 2, %s27
        %s272 = smul.u32 2, %s27
        %p273 = scmp.eq.s32.totalorder %s27, 0
        // Predicated region
        $region37: #{tpu_custom_call.1} parent=27 // pred_check
          %p274 = pneg %p273
        $region38: #{tpu_custom_call.1} parent=27 // pred_check_branch
          %276 = sbr.rel (%p274) target = $region40
        $region39: #{tpu_custom_call.1} parent=27 // pred_region
          %277 = vst [vmem:[#allocation2] sm:$0x1] 0.0
          %278 = vst [vmem:[#allocation3] sm:$0x1] 0.0
          %279 = vst [vmem:[#allocation4] sm:$0x1] 0.0
          %280 = vst [vmem:[#allocation5] sm:$0x1] 0.0
        $region40: #{tpu_custom_call.1} parent=27 // pred_fallthru
          _
        %v281 = vld [vmem:[%s237] sm:$0xff]
        %v282 = vld [vmem:[%s237 + $0x8] sm:$0xff]
        %v283 = vand.u32 2147483647, %v281
        %v284 = vand.u32 2147483647, %v282
        %285 = vmatprep.subr.mxu0 0.0
        %286 = vmatpush1.msra.mxu0 1.0
        %287 = vmatprep.subr.mxu0 0.0
        %288 = vmatpush1.msra.mxu0 1.0
        %289 = vmatprep.subr.mxu0 0.0
        %290 = vmatpush1.msra.mxu0 1.0
        %291 = vmatprep.subr.mxu0 0.0
        %292 = vmatpush1.msra.mxu0 1.0
        %293 = vmatprep.subr.mxu0 0.0
        %294 = vmatpush1.msra.mxu0 1.0
        %295 = vmatprep.subr.mxu0 0.0
        %296 = vmatpush1.msra.mxu0 1.0
        %297 = vmatprep.subr.mxu0 0.0
        %298 = vmatpush1.msra.mxu0 1.0
        %299 = vmatprep.subr.mxu0 0.0
        %300 = vmatpush1.msra.mxu0 1.0
        %301 = vmatprep.subr.mxu0 0.0
        %302 = vmatpush1.msra.mxu0 1.0
        %303 = vmatprep.subr.mxu0 0.0
        %304 = vmatpush1.msra.mxu0 1.0
        %305 = vmatprep.subr.mxu0 0.0
        %306 = vmatpush1.msra.mxu0 1.0
        %307 = vmatprep.subr.mxu0 0.0
        %308 = vmatpush1.msra.mxu0 1.0
        %309 = vmatprep.subr.mxu0 0.0
        %310 = vmatpush1.msra.mxu0 1.0
        %311 = vmatprep.subr.mxu0 0.0
        %312 = vmatpush1.msra.mxu0 1.0
        %313 = vmatprep.subr.mxu0 0.0
        %314 = vmatpush1.msra.mxu0 1.0
        %315 = vmatprep.subr.mxu0 0.0
        %316 = vmatpush1.msra.mxu0 1.0
        %317 = vmatprep.subr.mxu0 0.0
        %318 = vmatpush1.msra.mxu0 0.0
        %319 = vmatprep.subr.mxu0 0.0
        %320 = vmatpush1.msra.mxu0 0.0
        %321 = vmatprep.subr.mxu0 0.0
        %322 = vmatpush1.msra.mxu0 0.0
        %323 = vmatprep.subr.mxu0 0.0
        %324 = vmatpush1.msra.mxu0 0.0
        %325 = vmatprep.subr.mxu0 0.0
        %326 = vmatpush1.msra.mxu0 0.0
        %327 = vmatprep.subr.mxu0 0.0
        %328 = vmatpush1.msra.mxu0 0.0
        %329 = vmatprep.subr.mxu0 0.0
        %330 = vmatpush1.msra.mxu0 0.0
        %331 = vmatprep.subr.mxu0 0.0
        %332 = vmatpush1.msra.mxu0 0.0
        %333 = vmatprep.subr.mxu0 0.0
        %334 = vmatpush1.msra.mxu0 0.0
        %335 = vmatprep.subr.mxu0 0.0
        %336 = vmatpush1.msra.mxu0 0.0
        %337 = vmatprep.subr.mxu0 0.0
        %338 = vmatpush1.msra.mxu0 0.0
        %339 = vmatprep.subr.mxu0 0.0
        %340 = vmatpush1.msra.mxu0 0.0
        %341 = vmatprep.subr.mxu0 0.0
        %342 = vmatpush1.msra.mxu0 0.0
        %343 = vmatprep.subr.mxu0 0.0
        %344 = vmatpush1.msra.mxu0 0.0
        %345 = vmatprep.subr.mxu0 0.0
        %346 = vmatpush1.msra.mxu0 0.0
        %347 = vmatprep.subr.mxu0 0.0
        %348 = vmatpush1.msra.mxu0 0.0
        %349 = vmatprep.mubr.f32.mxu0 0.0
        %v350 = vand.u32 %v283, 4294901760
        %v351 = vsub.f32 %v283, %v350
        %v352 = vand.u32 %v351, 4294901760
        %v353 = vsub.f32 %v351, %v352
        %v354 = vand.u32 %v353, 4294901760
        %355 = vmatmul.mubr.f32.gmra.mrb[0].mxu0 %v354
        %v356 = vpop.f32.mrb[0].mxu0
        %v357 = vadd.f32 0.0, %v356
        %v358 = vpop.f32.mrb[0].mxu0
        %359 = vmatprep.mubr.f32.mxu0 0.0
        %v360 = vand.u32 %v284, 4294901760
        %v361 = vsub.f32 %v284, %v360
        %v362 = vand.u32 %v361, 4294901760
        %v363 = vsub.f32 %v361, %v362
        %v364 = vand.u32 %v363, 4294901760
        %365 = vmatmul.mubr.f32.gmra.mrb[0].mxu0 %v364
        %v366 = vpop.f32.mrb[0].mxu0
        %v367 = vadd.f32 0.0, %v366
        %v368 = vpop.f32.mrb[0].mxu0
        %369 = vdwg.mxu0
        %370 = vmatprep.subr.mxu0 0.0
        %371 = vmatpush1.msra.mxu0 0.0
        %372 = vmatprep.subr.mxu0 0.0
        %373 = vmatpush1.msra.mxu0 0.0
        %374 = vmatprep.subr.mxu0 0.0
        %375 = vmatpush1.msra.mxu0 0.0
        %376 = vmatprep.subr.mxu0 0.0
        %377 = vmatpush1.msra.mxu0 0.0
        %378 = vmatprep.subr.mxu0 0.0
        %379 = vmatpush1.msra.mxu0 0.0
        %380 = vmatprep.subr.mxu0 0.0
        %381 = vmatpush1.msra.mxu0 0.0
        %382 = vmatprep.subr.mxu0 0.0
        %383 = vmatpush1.msra.mxu0 0.0
        %384 = vmatprep.subr.mxu0 0.0
        %385 = vmatpush1.msra.mxu0 0.0
        %386 = vmatprep.subr.mxu0 0.0
        %387 = vmatpush1.msra.mxu0 0.0
        %388 = vmatprep.subr.mxu0 0.0
        %389 = vmatpush1.msra.mxu0 0.0
        %390 = vmatprep.subr.mxu0 0.0
        %391 = vmatpush1.msra.mxu0 0.0
        %392 = vmatprep.subr.mxu0 0.0
        %393 = vmatpush1.msra.mxu0 0.0
        %394 = vmatprep.subr.mxu0 0.0
        %395 = vmatpush1.msra.mxu0 0.0
        %396 = vmatprep.subr.mxu0 0.0
        %397 = vmatpush1.msra.mxu0 0.0
        %398 = vmatprep.subr.mxu0 0.0
        %399 = vmatpush1.msra.mxu0 0.0
        %400 = vmatprep.subr.mxu0 0.0
        %401 = vmatpush1.msra.mxu0 0.0
        %402 = vmatprep.subr.mxu0 0.0
        %403 = vmatpush1.msra.mxu0 0.0
        %404 = vmatprep.subr.mxu0 0.0
        %405 = vmatpush1.msra.mxu0 0.0
        %406 = vmatprep.subr.mxu0 0.0
        %407 = vmatpush1.msra.mxu0 0.0
        %408 = vmatprep.subr.mxu0 0.0
        %409 = vmatpush1.msra.mxu0 0.0
        %410 = vmatprep.subr.mxu0 0.0
        %411 = vmatpush1.msra.mxu0 0.0
        %412 = vmatprep.subr.mxu0 0.0
        %413 = vmatpush1.msra.mxu0 0.0
        %414 = vmatprep.subr.mxu0 0.0
        %415 = vmatpush1.msra.mxu0 0.0
        %416 = vmatprep.subr.mxu0 0.0
        %417 = vmatpush1.msra.mxu0 0.0
        %418 = vmatprep.subr.mxu0 0.0
        %419 = vmatpush1.msra.mxu0 0.0
        %420 = vmatprep.subr.mxu0 0.0
        %421 = vmatpush1.msra.mxu0 0.0
        %422 = vmatprep.subr.mxu0 0.0
        %423 = vmatpush1.msra.mxu0 0.0
        %424 = vmatprep.subr.mxu0 0.0
        %425 = vmatpush1.msra.mxu0 0.0
        %426 = vmatprep.subr.mxu0 0.0
        %427 = vmatpush1.msra.mxu0 0.0
        %428 = vmatprep.subr.mxu0 0.0
        %429 = vmatpush1.msra.mxu0 0.0
        %430 = vmatprep.subr.mxu0 0.0
        %431 = vmatpush1.msra.mxu0 0.0
        %432 = vmatprep.subr.mxu0 0.0
        %433 = vmatpush1.msra.mxu0 0.0
        %434 = vmatprep.mubr.f32.mxu0 0.0
        %v435 = vand.u32 %v283, 4294901760
        %436 = vmatmul.mubr.f32.gmra.mrb[0].mxu0 %v435
        %v437 = vpop.f32.mrb[0].mxu0
        %v438 = vadd.f32 %v357, %v437
        %v439 = vpop.f32.mrb[0].mxu0
        %440 = vmatprep.mubr.f32.mxu0 0.0
        %v441 = vand.u32 %v284, 4294901760
        %442 = vmatmul.mubr.f32.gmra.mrb[0].mxu0 %v441
        %v443 = vpop.f32.mrb[0].mxu0
        %v444 = vadd.f32 %v367, %v443
        %v445 = vpop.f32.mrb[0].mxu0
        %446 = vdwg.mxu0
        %447 = vmatprep.subr.mxu0 0.0
        %448 = vmatpush1.msra.mxu0 0.0
        %449 = vmatprep.subr.mxu0 0.0
        %450 = vmatpush1.msra.mxu0 0.0
        %451 = vmatprep.subr.mxu0 0.0
        %452 = vmatpush1.msra.mxu0 0.0
        %453 = vmatprep.subr.mxu0 0.0
        %454 = vmatpush1.msra.mxu0 0.0
        %455 = vmatprep.subr.mxu0 0.0
        %456 = vmatpush1.msra.mxu0 0.0
        %457 = vmatprep.subr.mxu0 0.0
        %458 = vmatpush1.msra.mxu0 0.0
        %459 = vmatprep.subr.mxu0 0.0
        %460 = vmatpush1.msra.mxu0 0.0
        %461 = vmatprep.subr.mxu0 0.0
        %462 = vmatpush1.msra.mxu0 0.0
        %463 = vmatprep.subr.mxu0 0.0
        %464 = vmatpush1.msra.mxu0 0.0
        %465 = vmatprep.subr.mxu0 0.0
        %466 = vmatpush1.msra.mxu0 0.0
        %467 = vmatprep.subr.mxu0 0.0
        %468 = vmatpush1.msra.mxu0 0.0
        %469 = vmatprep.subr.mxu0 0.0
        %470 = vmatpush1.msra.mxu0 0.0
        %471 = vmatprep.subr.mxu0 0.0
        %472 = vmatpush1.msra.mxu0 0.0
        %473 = vmatprep.subr.mxu0 0.0
        %474 = vmatpush1.msra.mxu0 0.0
        %475 = vmatprep.subr.mxu0 0.0
        %476 = vmatpush1.msra.mxu0 0.0
        %477 = vmatprep.subr.mxu0 0.0
        %478 = vmatpush1.msra.mxu0 0.0
        %479 = vmatprep.subr.mxu0 0.0
        %480 = vmatpush1.msra.mxu0 0.0
        %481 = vmatprep.subr.mxu0 0.0
        %482 = vmatpush1.msra.mxu0 0.0
        %483 = vmatprep.subr.mxu0 0.0
        %484 = vmatpush1.msra.mxu0 0.0
        %485 = vmatprep.subr.mxu0 0.0
        %486 = vmatpush1.msra.mxu0 0.0
        %487 = vmatprep.subr.mxu0 0.0
        %488 = vmatpush1.msra.mxu0 0.0
        %489 = vmatprep.subr.mxu0 0.0
        %490 = vmatpush1.msra.mxu0 0.0
        %491 = vmatprep.subr.mxu0 0.0
        %492 = vmatpush1.msra.mxu0 0.0
        %493 = vmatprep.subr.mxu0 0.0
        %494 = vmatpush1.msra.mxu0 0.0
        %495 = vmatprep.subr.mxu0 0.0
        %496 = vmatpush1.msra.mxu0 0.0
        %497 = vmatprep.subr.mxu0 0.0
        %498 = vmatpush1.msra.mxu0 0.0
        %499 = vmatprep.subr.mxu0 0.0
        %500 = vmatpush1.msra.mxu0 0.0
        %501 = vmatprep.subr.mxu0 0.0
        %502 = vmatpush1.msra.mxu0 0.0
        %503 = vmatprep.subr.mxu0 0.0
        %504 = vmatpush1.msra.mxu0 0.0
        %505 = vmatprep.subr.mxu0 0.0
        %506 = vmatpush1.msra.mxu0 0.0
        %507 = vmatprep.subr.mxu0 0.0
        %508 = vmatpush1.msra.mxu0 0.0
        %509 = vmatprep.subr.mxu0 0.0
        %510 = vmatpush1.msra.mxu0 0.0
        %511 = vmatprep.mubr.f32.mxu0 0.0
        %v512 = vand.u32 %v283, 4294901760
        %v513 = vsub.f32 %v283, %v512
        %514 = vmatmul.mubr.f32.gmra.mrb[0].mxu0 %v513
        %v515 = vpop.f32.mrb[0].mxu0
        %v516 = vadd.f32 %v438, %v515
        %v517 = vpop.f32.mrb[0].mxu0
        %518 = vmatprep.mubr.f32.mxu0 0.0
        %v519 = vand.u32 %v284, 4294901760
        %v520 = vsub.f32 %v284, %v519
        %521 = vmatmul.mubr.f32.gmra.mrb[0].mxu0 %v520
        %v522 = vpop.f32.mrb[0].mxu0
        %v523 = vadd.f32 %v444, %v522
        %v524 = vpop.f32.mrb[0].mxu0
        %525 = vdwg.mxu0
        %526 = vmatprep.subr.mxu0 0.0
        %527 = vmatpush1.msra.mxu0 1.0
        %528 = vmatprep.subr.mxu0 0.0
        %529 = vmatpush1.msra.mxu0 1.0
        %530 = vmatprep.subr.mxu0 0.0
        %531 = vmatpush1.msra.mxu0 1.0
        %532 = vmatprep.subr.mxu0 0.0
        %533 = vmatpush1.msra.mxu0 1.0
        %534 = vmatprep.subr.mxu0 0.0
        %535 = vmatpush1.msra.mxu0 1.0
        %536 = vmatprep.subr.mxu0 0.0
        %537 = vmatpush1.msra.mxu0 1.0
        %538 = vmatprep.subr.mxu0 0.0
        %539 = vmatpush1.msra.mxu0 1.0
        %540 = vmatprep.subr.mxu0 0.0
        %541 = vmatpush1.msra.mxu0 1.0
        %542 = vmatprep.subr.mxu0 0.0
        %543 = vmatpush1.msra.mxu0 1.0
        %544 = vmatprep.subr.mxu0 0.0
        %545 = vmatpush1.msra.mxu0 1.0
        %546 = vmatprep.subr.mxu0 0.0
        %547 = vmatpush1.msra.mxu0 1.0
        %548 = vmatprep.subr.mxu0 0.0
        %549 = vmatpush1.msra.mxu0 1.0
        %550 = vmatprep.subr.mxu0 0.0
        %551 = vmatpush1.msra.mxu0 1.0
        %552 = vmatprep.subr.mxu0 0.0
        %553 = vmatpush1.msra.mxu0 1.0
        %554 = vmatprep.subr.mxu0 0.0
        %555 = vmatpush1.msra.mxu0 1.0
        %556 = vmatprep.subr.mxu0 0.0
        %557 = vmatpush1.msra.mxu0 1.0
        %558 = vmatprep.subr.mxu0 0.0
        %559 = vmatpush1.msra.mxu0 0.0
        %560 = vmatprep.subr.mxu0 0.0
        %561 = vmatpush1.msra.mxu0 0.0
        %562 = vmatprep.subr.mxu0 0.0
        %563 = vmatpush1.msra.mxu0 0.0
        %564 = vmatprep.subr.mxu0 0.0
        %565 = vmatpush1.msra.mxu0 0.0
        %566 = vmatprep.subr.mxu0 0.0
        %567 = vmatpush1.msra.mxu0 0.0
        %568 = vmatprep.subr.mxu0 0.0
        %569 = vmatpush1.msra.mxu0 0.0
        %570 = vmatprep.subr.mxu0 0.0
        %571 = vmatpush1.msra.mxu0 0.0
        %572 = vmatprep.subr.mxu0 0.0
        %573 = vmatpush1.msra.mxu0 0.0
        %574 = vmatprep.subr.mxu0 0.0
        %575 = vmatpush1.msra.mxu0 0.0
        %576 = vmatprep.subr.mxu0 0.0
        %577 = vmatpush1.msra.mxu0 0.0
        %578 = vmatprep.subr.mxu0 0.0
        %579 = vmatpush1.msra.mxu0 0.0
        %580 = vmatprep.subr.mxu0 0.0
        %581 = vmatpush1.msra.mxu0 0.0
        %582 = vmatprep.subr.mxu0 0.0
        %583 = vmatpush1.msra.mxu0 0.0
        %584 = vmatprep.subr.mxu0 0.0
        %585 = vmatpush1.msra.mxu0 0.0
        %586 = vmatprep.subr.mxu0 0.0
        %587 = vmatpush1.msra.mxu0 0.0
        %588 = vmatprep.subr.mxu0 0.0
        %589 = vmatpush1.msra.mxu0 0.0
        %590 = vmatprep.mubr.f32.mxu0 0.0
        %v591 = vand.u32 %v283, 4294901760
        %v592 = vsub.f32 %v283, %v591
        %v593 = vand.u32 %v592, 4294901760
        %594 = vmatmul.mubr.f32.gmra.mrb[0].mxu0 %v593
        %v595 = vpop.f32.mrb[0].mxu0
        %v596 = vadd.f32 %v516, %v595
        %v597 = vpop.f32.mrb[0].mxu0
        %598 = vmatprep.mubr.f32.mxu0 0.0
        %v599 = vand.u32 %v284, 4294901760
        %v600 = vsub.f32 %v284, %v599
        %v601 = vand.u32 %v600, 4294901760
        %602 = vmatmul.mubr.f32.gmra.mrb[0].mxu0 %v601
        %v603 = vpop.f32.mrb[0].mxu0
        %v604 = vadd.f32 %v523, %v603
        %v605 = vpop.f32.mrb[0].mxu0
        %606 = vdwg.mxu0
        %607 = vmatprep.subr.mxu0 0.0
        %608 = vmatpush1.msra.mxu0 0.0
        %609 = vmatprep.subr.mxu0 0.0
        %610 = vmatpush1.msra.mxu0 0.0
        %611 = vmatprep.subr.mxu0 0.0
        %612 = vmatpush1.msra.mxu0 0.0
        %613 = vmatprep.subr.mxu0 0.0
        %614 = vmatpush1.msra.mxu0 0.0
        %615 = vmatprep.subr.mxu0 0.0
        %616 = vmatpush1.msra.mxu0 0.0
        %617 = vmatprep.subr.mxu0 0.0
        %618 = vmatpush1.msra.mxu0 0.0
        %619 = vmatprep.subr.mxu0 0.0
        %620 = vmatpush1.msra.mxu0 0.0
        %621 = vmatprep.subr.mxu0 0.0
        %622 = vmatpush1.msra.mxu0 0.0
        %623 = vmatprep.subr.mxu0 0.0
        %624 = vmatpush1.msra.mxu0 0.0
        %625 = vmatprep.subr.mxu0 0.0
        %626 = vmatpush1.msra.mxu0 0.0
        %627 = vmatprep.subr.mxu0 0.0
        %628 = vmatpush1.msra.mxu0 0.0
        %629 = vmatprep.subr.mxu0 0.0
        %630 = vmatpush1.msra.mxu0 0.0
        %631 = vmatprep.subr.mxu0 0.0
        %632 = vmatpush1.msra.mxu0 0.0
        %633 = vmatprep.subr.mxu0 0.0
        %634 = vmatpush1.msra.mxu0 0.0
        %635 = vmatprep.subr.mxu0 0.0
        %636 = vmatpush1.msra.mxu0 0.0
        %637 = vmatprep.subr.mxu0 0.0
        %638 = vmatpush1.msra.mxu0 0.0
        %639 = vmatprep.subr.mxu0 0.0
        %640 = vmatpush1.msra.mxu0 0.0
        %641 = vmatprep.subr.mxu0 0.0
        %642 = vmatpush1.msra.mxu0 0.0
        %643 = vmatprep.subr.mxu0 0.0
        %644 = vmatpush1.msra.mxu0 0.0
        %645 = vmatprep.subr.mxu0 0.0
        %646 = vmatpush1.msra.mxu0 0.0
        %647 = vmatprep.subr.mxu0 0.0
        %648 = vmatpush1.msra.mxu0 0.0
        %649 = vmatprep.subr.mxu0 0.0
        %650 = vmatpush1.msra.mxu0 0.0
        %651 = vmatprep.subr.mxu0 0.0
        %652 = vmatpush1.msra.mxu0 0.0
        %653 = vmatprep.subr.mxu0 0.0
        %654 = vmatpush1.msra.mxu0 0.0
        %655 = vmatprep.subr.mxu0 0.0
        %656 = vmatpush1.msra.mxu0 0.0
        %657 = vmatprep.subr.mxu0 0.0
        %658 = vmatpush1.msra.mxu0 0.0
        %659 = vmatprep.subr.mxu0 0.0
        %660 = vmatpush1.msra.mxu0 0.0
        %661 = vmatprep.subr.mxu0 0.0
        %662 = vmatpush1.msra.mxu0 0.0
        %663 = vmatprep.subr.mxu0 0.0
        %664 = vmatpush1.msra.mxu0 0.0
        %665 = vmatprep.subr.mxu0 0.0
        %666 = vmatpush1.msra.mxu0 0.0
        %667 = vmatprep.subr.mxu0 0.0
        %668 = vmatpush1.msra.mxu0 0.0
        %669 = vmatprep.subr.mxu0 0.0
        %670 = vmatpush1.msra.mxu0 0.0
        %671 = vmatprep.mubr.f32.mxu0 0.0
        %v672 = vand.u32 %v283, 4294901760
        %673 = vmatmul.mubr.f32.gmra.mrb[0].mxu0 %v672
        %v674 = vpop.f32.mrb[0].mxu0
        %v675 = vadd.f32 %v596, %v674
        %v676 = vpop.f32.mrb[0].mxu0
        %677 = vmatprep.mubr.f32.mxu0 0.0
        %v678 = vand.u32 %v284, 4294901760
        %679 = vmatmul.mubr.f32.gmra.mrb[0].mxu0 %v678
        %v680 = vpop.f32.mrb[0].mxu0
        %v681 = vadd.f32 %v604, %v680
        %v682 = vpop.f32.mrb[0].mxu0
        %683 = vdwg.mxu0
        %684 = vmatprep.subr.mxu0 0.0
        %685 = vmatpush1.msra.mxu0 1.0
        %686 = vmatprep.subr.mxu0 0.0
        %687 = vmatpush1.msra.mxu0 1.0
        %688 = vmatprep.subr.mxu0 0.0
        %689 = vmatpush1.msra.mxu0 1.0
        %690 = vmatprep.subr.mxu0 0.0
        %691 = vmatpush1.msra.mxu0 1.0
        %692 = vmatprep.subr.mxu0 0.0
        %693 = vmatpush1.msra.mxu0 1.0
        %694 = vmatprep.subr.mxu0 0.0
        %695 = vmatpush1.msra.mxu0 1.0
        %696 = vmatprep.subr.mxu0 0.0
        %697 = vmatpush1.msra.mxu0 1.0
        %698 = vmatprep.subr.mxu0 0.0
        %699 = vmatpush1.msra.mxu0 1.0
        %700 = vmatprep.subr.mxu0 0.0
        %701 = vmatpush1.msra.mxu0 1.0
        %702 = vmatprep.subr.mxu0 0.0
        %703 = vmatpush1.msra.mxu0 1.0
        %704 = vmatprep.subr.mxu0 0.0
        %705 = vmatpush1.msra.mxu0 1.0
        %706 = vmatprep.subr.mxu0 0.0
        %707 = vmatpush1.msra.mxu0 1.0
        %708 = vmatprep.subr.mxu0 0.0
        %709 = vmatpush1.msra.mxu0 1.0
        %710 = vmatprep.subr.mxu0 0.0
        %711 = vmatpush1.msra.mxu0 1.0
        %712 = vmatprep.subr.mxu0 0.0
        %713 = vmatpush1.msra.mxu0 1.0
        %714 = vmatprep.subr.mxu0 0.0
        %715 = vmatpush1.msra.mxu0 1.0
        %716 = vmatprep.subr.mxu0 0.0
        %717 = vmatpush1.msra.mxu0 0.0
        %718 = vmatprep.subr.mxu0 0.0
        %719 = vmatpush1.msra.mxu0 0.0
        %720 = vmatprep.subr.mxu0 0.0
        %721 = vmatpush1.msra.mxu0 0.0
        %722 = vmatprep.subr.mxu0 0.0
        %723 = vmatpush1.msra.mxu0 0.0
        %724 = vmatprep.subr.mxu0 0.0
        %725 = vmatpush1.msra.mxu0 0.0
        %726 = vmatprep.subr.mxu0 0.0
        %727 = vmatpush1.msra.mxu0 0.0
        %728 = vmatprep.subr.mxu0 0.0
        %729 = vmatpush1.msra.mxu0 0.0
        %730 = vmatprep.subr.mxu0 0.0
        %731 = vmatpush1.msra.mxu0 0.0
        %732 = vmatprep.subr.mxu0 0.0
        %733 = vmatpush1.msra.mxu0 0.0
        %734 = vmatprep.subr.mxu0 0.0
        %735 = vmatpush1.msra.mxu0 0.0
        %736 = vmatprep.subr.mxu0 0.0
        %737 = vmatpush1.msra.mxu0 0.0
        %738 = vmatprep.subr.mxu0 0.0
        %739 = vmatpush1.msra.mxu0 0.0
        %740 = vmatprep.subr.mxu0 0.0
        %741 = vmatpush1.msra.mxu0 0.0
        %742 = vmatprep.subr.mxu0 0.0
        %743 = vmatpush1.msra.mxu0 0.0
        %744 = vmatprep.subr.mxu0 0.0
        %745 = vmatpush1.msra.mxu0 0.0
        %746 = vmatprep.subr.mxu0 0.0
        %747 = vmatpush1.msra.mxu0 0.0
        %748 = vmatprep.mubr.f32.mxu0 0.0
        %v749 = vand.u32 %v283, 4294901760
        %750 = vmatmul.mubr.f32.gmra.mrb[0].mxu0 %v749
        %v751 = vpop.f32.mrb[0].mxu0
        %v752 = vadd.f32 %v675, %v751
        %v753 = vpop.f32.mrb[0].mxu0
        %754 = vmatprep.mubr.f32.mxu0 0.0
        %v755 = vand.u32 %v284, 4294901760
        %756 = vmatmul.mubr.f32.gmra.mrb[0].mxu0 %v755
        %v757 = vpop.f32.mrb[0].mxu0
        %v758 = vadd.f32 %v681, %v757
        %v759 = vpop.f32.mrb[0].mxu0
        %760 = vdwg.mxu0
        %s761 = scalar_lea.vmem %s237, 16 [#allocation6]
        %v762 = vld [vmem:[%s761] sm:$0xff]
        %v763 = vld [vmem:[%s761 + $0x8] sm:$0xff]
        %v764 = vand.u32 2147483647, %v762
        %v765 = vand.u32 2147483647, %v763
        %766 = vmatprep.subr.mxu0 0.0
        %767 = vmatpush1.msra.mxu0 1.0
        %768 = vmatprep.subr.mxu0 0.0
        %769 = vmatpush1.msra.mxu0 1.0
        %770 = vmatprep.subr.mxu0 0.0
        %771 = vmatpush1.msra.mxu0 1.0
        %772 = vmatprep.subr.mxu0 0.0
        %773 = vmatpush1.msra.mxu0 1.0
        %774 = vmatprep.subr.mxu0 0.0
        %775 = vmatpush1.msra.mxu0 1.0
        %776 = vmatprep.subr.mxu0 0.0
        %777 = vmatpush1.msra.mxu0 1.0
        %778 = vmatprep.subr.mxu0 0.0
        %779 = vmatpush1.msra.mxu0 1.0
        %780 = vmatprep.subr.mxu0 0.0
        %781 = vmatpush1.msra.mxu0 1.0
        %782 = vmatprep.subr.mxu0 0.0
        %783 = vmatpush1.msra.mxu0 1.0
        %784 = vmatprep.subr.mxu0 0.0
        %785 = vmatpush1.msra.mxu0 1.0
        %786 = vmatprep.subr.mxu0 0.0
        %787 = vmatpush1.msra.mxu0 1.0
        %788 = vmatprep.subr.mxu0 0.0
        %789 = vmatpush1.msra.mxu0 1.0
        %790 = vmatprep.subr.mxu0 0.0
        %791 = vmatpush1.msra.mxu0 1.0
        %792 = vmatprep.subr.mxu0 0.0
        %793 = vmatpush1.msra.mxu0 1.0
        %794 = vmatprep.subr.mxu0 0.0
        %795 = vmatpush1.msra.mxu0 1.0
        %796 = vmatprep.subr.mxu0 0.0
        %797 = vmatpush1.msra.mxu0 1.0
        %798 = vmatprep.subr.mxu0 0.0
        %799 = vmatpush1.msra.mxu0 0.0
        %800 = vmatprep.subr.mxu0 0.0
        %801 = vmatpush1.msra.mxu0 0.0
        %802 = vmatprep.subr.mxu0 0.0
        %803 = vmatpush1.msra.mxu0 0.0
        %804 = vmatprep.subr.mxu0 0.0
        %805 = vmatpush1.msra.mxu0 0.0
        %806 = vmatprep.subr.mxu0 0.0
        %807 = vmatpush1.msra.mxu0 0.0
        %808 = vmatprep.subr.mxu0 0.0
        %809 = vmatpush1.msra.mxu0 0.0
        %810 = vmatprep.subr.mxu0 0.0
        %811 = vmatpush1.msra.mxu0 0.0
        %812 = vmatprep.subr.mxu0 0.0
        %813 = vmatpush1.msra.mxu0 0.0
        %814 = vmatprep.subr.mxu0 0.0
        %815 = vmatpush1.msra.mxu0 0.0
        %816 = vmatprep.subr.mxu0 0.0
        %817 = vmatpush1.msra.mxu0 0.0
        %818 = vmatprep.subr.mxu0 0.0
        %819 = vmatpush1.msra.mxu0 0.0
        %820 = vmatprep.subr.mxu0 0.0
        %821 = vmatpush1.msra.mxu0 0.0
        %822 = vmatprep.subr.mxu0 0.0
        %823 = vmatpush1.msra.mxu0 0.0
        %824 = vmatprep.subr.mxu0 0.0
        %825 = vmatpush1.msra.mxu0 0.0
        %826 = vmatprep.subr.mxu0 0.0
        %827 = vmatpush1.msra.mxu0 0.0
        %828 = vmatprep.subr.mxu0 0.0
        %829 = vmatpush1.msra.mxu0 0.0
        %830 = vmatprep.mubr.f32.mxu0 0.0
        %v831 = vand.u32 %v764, 4294901760
        %v832 = vsub.f32 %v764, %v831
        %v833 = vand.u32 %v832, 4294901760
        %v834 = vsub.f32 %v832, %v833
        %v835 = vand.u32 %v834, 4294901760
        %836 = vmatmul.mubr.f32.gmra.mrb[0].mxu0 %v835
        %v837 = vpop.f32.mrb[0].mxu0
        %v838 = vadd.f32 0.0, %v837
        %v839 = vpop.f32.mrb[0].mxu0
        %840 = vmatprep.mubr.f32.mxu0 0.0
        %v841 = vand.u32 %v765, 4294901760
        %v842 = vsub.f32 %v765, %v841
        %v843 = vand.u32 %v842, 4294901760
        %v844 = vsub.f32 %v842, %v843
        %v845 = vand.u32 %v844, 4294901760
        %846 = vmatmul.mubr.f32.gmra.mrb[0].mxu0 %v845
        %v847 = vpop.f32.mrb[0].mxu0
        %v848 = vadd.f32 0.0, %v847
        %v849 = vpop.f32.mrb[0].mxu0
        %850 = vdwg.mxu0
        %851 = vmatprep.subr.mxu0 0.0
        %852 = vmatpush1.msra.mxu0 0.0
        %853 = vmatprep.subr.mxu0 0.0
        %854 = vmatpush1.msra.mxu0 0.0
        %855 = vmatprep.subr.mxu0 0.0
        %856 = vmatpush1.msra.mxu0 0.0
        %857 = vmatprep.subr.mxu0 0.0
        %858 = vmatpush1.msra.mxu0 0.0
        %859 = vmatprep.subr.mxu0 0.0
        %860 = vmatpush1.msra.mxu0 0.0
        %861 = vmatprep.subr.mxu0 0.0
        %862 = vmatpush1.msra.mxu0 0.0
        %863 = vmatprep.subr.mxu0 0.0
        %864 = vmatpush1.msra.mxu0 0.0
        %865 = vmatprep.subr.mxu0 0.0
        %866 = vmatpush1.msra.mxu0 0.0
        %867 = vmatprep.subr.mxu0 0.0
        %868 = vmatpush1.msra.mxu0 0.0
        %869 = vmatprep.subr.mxu0 0.0
        %870 = vmatpush1.msra.mxu0 0.0
        %871 = vmatprep.subr.mxu0 0.0
        %872 = vmatpush1.msra.mxu0 0.0
        %873 = vmatprep.subr.mxu0 0.0
        %874 = vmatpush1.msra.mxu0 0.0
        %875 = vmatprep.subr.mxu0 0.0
        %876 = vmatpush1.msra.mxu0 0.0
        %877 = vmatprep.subr.mxu0 0.0
        %878 = vmatpush1.msra.mxu0 0.0
        %879 = vmatprep.subr.mxu0 0.0
        %880 = vmatpush1.msra.mxu0 0.0
        %881 = vmatprep.subr.mxu0 0.0
        %882 = vmatpush1.msra.mxu0 0.0
        %883 = vmatprep.subr.mxu0 0.0
        %884 = vmatpush1.msra.mxu0 0.0
        %885 = vmatprep.subr.mxu0 0.0
        %886 = vmatpush1.msra.mxu0 0.0
        %887 = vmatprep.subr.mxu0 0.0
        %888 = vmatpush1.msra.mxu0 0.0
        %889 = vmatprep.subr.mxu0 0.0
        %890 = vmatpush1.msra.mxu0 0.0
        %891 = vmatprep.subr.mxu0 0.0
        %892 = vmatpush1.msra.mxu0 0.0
        %893 = vmatprep.subr.mxu0 0.0
        %894 = vmatpush1.msra.mxu0 0.0
        %895 = vmatprep.subr.mxu0 0.0
        %896 = vmatpush1.msra.mxu0 0.0
        %897 = vmatprep.subr.mxu0 0.0
        %898 = vmatpush1.msra.mxu0 0.0
        %899 = vmatprep.subr.mxu0 0.0
        %900 = vmatpush1.msra.mxu0 0.0
        %901 = vmatprep.subr.mxu0 0.0
        %902 = vmatpush1.msra.mxu0 0.0
        %903 = vmatprep.subr.mxu0 0.0
        %904 = vmatpush1.msra.mxu0 0.0
        %905 = vmatprep.subr.mxu0 0.0
        %906 = vmatpush1.msra.mxu0 0.0
        %907 = vmatprep.subr.mxu0 0.0
        %908 = vmatpush1.msra.mxu0 0.0
        %909 = vmatprep.subr.mxu0 0.0
        %910 = vmatpush1.msra.mxu0 0.0
        %911 = vmatprep.subr.mxu0 0.0
        %912 = vmatpush1.msra.mxu0 0.0
        %913 = vmatprep.subr.mxu0 0.0
        %914 = vmatpush1.msra.mxu0 0.0
        %915 = vmatprep.mubr.f32.mxu0 0.0
        %v916 = vand.u32 %v764, 4294901760
        %917 = vmatmul.mubr.f32.gmra.mrb[0].mxu0 %v916
        %v918 = vpop.f32.mrb[0].mxu0
        %v919 = vadd.f32 %v838, %v918
        %v920 = vpop.f32.mrb[0].mxu0
        %921 = vmatprep.mubr.f32.mxu0 0.0
        %v922 = vand.u32 %v765, 4294901760
        %923 = vmatmul.mubr.f32.gmra.mrb[0].mxu0 %v922
        %v924 = vpop.f32.mrb[0].mxu0
        %v925 = vadd.f32 %v848, %v924
        %v926 = vpop.f32.mrb[0].mxu0
        %927 = vdwg.mxu0
        %928 = vmatprep.subr.mxu0 0.0
        %929 = vmatpush1.msra.mxu0 0.0
        %930 = vmatprep.subr.mxu0 0.0
        %931 = vmatpush1.msra.mxu0 0.0
        %932 = vmatprep.subr.mxu0 0.0
        %933 = vmatpush1.msra.mxu0 0.0
        %934 = vmatprep.subr.mxu0 0.0
        %935 = vmatpush1.msra.mxu0 0.0
        %936 = vmatprep.subr.mxu0 0.0
        %937 = vmatpush1.msra.mxu0 0.0
        %938 = vmatprep.subr.mxu0 0.0
        %939 = vmatpush1.msra.mxu0 0.0
        %940 = vmatprep.subr.mxu0 0.0
        %941 = vmatpush1.msra.mxu0 0.0
        %942 = vmatprep.subr.mxu0 0.0
        %943 = vmatpush1.msra.mxu0 0.0
        %944 = vmatprep.subr.mxu0 0.0
        %945 = vmatpush1.msra.mxu0 0.0
        %946 = vmatprep.subr.mxu0 0.0
        %947 = vmatpush1.msra.mxu0 0.0
        %948 = vmatprep.subr.mxu0 0.0
        %949 = vmatpush1.msra.mxu0 0.0
        %950 = vmatprep.subr.mxu0 0.0
        %951 = vmatpush1.msra.mxu0 0.0
        %952 = vmatprep.subr.mxu0 0.0
        %953 = vmatpush1.msra.mxu0 0.0
        %954 = vmatprep.subr.mxu0 0.0
        %955 = vmatpush1.msra.mxu0 0.0
        %956 = vmatprep.subr.mxu0 0.0
        %957 = vmatpush1.msra.mxu0 0.0
        %958 = vmatprep.subr.mxu0 0.0
        %959 = vmatpush1.msra.mxu0 0.0
        %960 = vmatprep.subr.mxu0 0.0
        %961 = vmatpush1.msra.mxu0 0.0
        %962 = vmatprep.subr.mxu0 0.0
        %963 = vmatpush1.msra.mxu0 0.0
        %964 = vmatprep.subr.mxu0 0.0
        %965 = vmatpush1.msra.mxu0 0.0
        %966 = vmatprep.subr.mxu0 0.0
        %967 = vmatpush1.msra.mxu0 0.0
        %968 = vmatprep.subr.mxu0 0.0
        %969 = vmatpush1.msra.mxu0 0.0
        %970 = vmatprep.subr.mxu0 0.0
        %971 = vmatpush1.msra.mxu0 0.0
        %972 = vmatprep.subr.mxu0 0.0
        %973 = vmatpush1.msra.mxu0 0.0
        %974 = vmatprep.subr.mxu0 0.0
        %975 = vmatpush1.msra.mxu0 0.0
        %976 = vmatprep.subr.mxu0 0.0
        %977 = vmatpush1.msra.mxu0 0.0
        %978 = vmatprep.subr.mxu0 0.0
        %979 = vmatpush1.msra.mxu0 0.0
        %980 = vmatprep.subr.mxu0 0.0
        %981 = vmatpush1.msra.mxu0 0.0
        %982 = vmatprep.subr.mxu0 0.0
        %983 = vmatpush1.msra.mxu0 0.0
        %984 = vmatprep.subr.mxu0 0.0
        %985 = vmatpush1.msra.mxu0 0.0
        %986 = vmatprep.subr.mxu0 0.0
        %987 = vmatpush1.msra.mxu0 0.0
        %988 = vmatprep.subr.mxu0 0.0
        %989 = vmatpush1.msra.mxu0 0.0
        %990 = vmatprep.subr.mxu0 0.0
        %991 = vmatpush1.msra.mxu0 0.0
        %992 = vmatprep.mubr.f32.mxu0 0.0
        %v993 = vand.u32 %v764, 4294901760
        %v994 = vsub.f32 %v764, %v993
        %995 = vmatmul.mubr.f32.gmra.mrb[0].mxu0 %v994
        %v996 = vpop.f32.mrb[0].mxu0
        %v997 = vadd.f32 %v919, %v996
        %v998 = vpop.f32.mrb[0].mxu0
        %999 = vmatprep.mubr.f32.mxu0 0.0
        %v1000 = vand.u32 %v765, 4294901760
        %v1001 = vsub.f32 %v765, %v1000
        %1002 = vmatmul.mubr.f32.gmra.mrb[0].mxu0 %v1001
        %v1003 = vpop.f32.mrb[0].mxu0
        %v1004 = vadd.f32 %v925, %v1003
        %v1005 = vpop.f32.mrb[0].mxu0
        %1006 = vdwg.mxu0
        %1007 = vmatprep.subr.mxu0 0.0
        %1008 = vmatpush1.msra.mxu0 1.0
        %1009 = vmatprep.subr.mxu0 0.0
        %1010 = vmatpush1.msra.mxu0 1.0
        %1011 = vmatprep.subr.mxu0 0.0
        %1012 = vmatpush1.msra.mxu0 1.0
        %1013 = vmatprep.subr.mxu0 0.0
        %1014 = vmatpush1.msra.mxu0 1.0
        %1015 = vmatprep.subr.mxu0 0.0
        %1016 = vmatpush1.msra.mxu0 1.0
        %1017 = vmatprep.subr.mxu0 0.0
        %1018 = vmatpush1.msra.mxu0 1.0
        %1019 = vmatprep.subr.mxu0 0.0
        %1020 = vmatpush1.msra.mxu0 1.0
        %1021 = vmatprep.subr.mxu0 0.0
        %1022 = vmatpush1.msra.mxu0 1.0
        %1023 = vmatprep.subr.mxu0 0.0
        %1024 = vmatpush1.msra.mxu0 1.0
        %1025 = vmatprep.subr.mxu0 0.0
        %1026 = vmatpush1.msra.mxu0 1.0
        %1027 = vmatprep.subr.mxu0 0.0
        %1028 = vmatpush1.msra.mxu0 1.0
        %1029 = vmatprep.subr.mxu0 0.0
        %1030 = vmatpush1.msra.mxu0 1.0
        %1031 = vmatprep.subr.mxu0 0.0
        %1032 = vmatpush1.msra.mxu0 1.0
        %1033 = vmatprep.subr.mxu0 0.0
        %1034 = vmatpush1.msra.mxu0 1.0
        %1035 = vmatprep.subr.mxu0 0.0
        %1036 = vmatpush1.msra.mxu0 1.0
        %1037 = vmatprep.subr.mxu0 0.0
        %1038 = vmatpush1.msra.mxu0 1.0
        %1039 = vmatprep.subr.mxu0 0.0
        %1040 = vmatpush1.msra.mxu0 0.0
        %1041 = vmatprep.subr.mxu0 0.0
        %1042 = vmatpush1.msra.mxu0 0.0
        %1043 = vmatprep.subr.mxu0 0.0
        %1044 = vmatpush1.msra.mxu0 0.0
        %1045 = vmatprep.subr.mxu0 0.0
        %1046 = vmatpush1.msra.mxu0 0.0
        %1047 = vmatprep.subr.mxu0 0.0
        %1048 = vmatpush1.msra.mxu0 0.0
        %1049 = vmatprep.subr.mxu0 0.0
        %1050 = vmatpush1.msra.mxu0 0.0
        %1051 = vmatprep.subr.mxu0 0.0
        %1052 = vmatpush1.msra.mxu0 0.0
        %1053 = vmatprep.subr.mxu0 0.0
        %1054 = vmatpush1.msra.mxu0 0.0
        %1055 = vmatprep.subr.mxu0 0.0
        %1056 = vmatpush1.msra.mxu0 0.0
        %1057 = vmatprep.subr.mxu0 0.0
        %1058 = vmatpush1.msra.mxu0 0.0
        %1059 = vmatprep.subr.mxu0 0.0
        %1060 = vmatpush1.msra.mxu0 0.0
        %1061 = vmatprep.subr.mxu0 0.0
        %1062 = vmatpush1.msra.mxu0 0.0
        %1063 = vmatprep.subr.mxu0 0.0
        %1064 = vmatpush1.msra.mxu0 0.0
        %1065 = vmatprep.subr.mxu0 0.0
        %1066 = vmatpush1.msra.mxu0 0.0
        %1067 = vmatprep.subr.mxu0 0.0
        %1068 = vmatpush1.msra.mxu0 0.0
        %1069 = vmatprep.subr.mxu0 0.0
        %1070 = vmatpush1.msra.mxu0 0.0
        %1071 = vmatprep.mubr.f32.mxu0 0.0
        %v1072 = vand.u32 %v764, 4294901760
        %v1073 = vsub.f32 %v764, %v1072
        %v1074 = vand.u32 %v1073, 4294901760
        %1075 = vmatmul.mubr.f32.gmra.mrb[0].mxu0 %v1074
        %v1076 = vpop.f32.mrb[0].mxu0
        %v1077 = vadd.f32 %v997, %v1076
        %v1078 = vpop.f32.mrb[0].mxu0
        %1079 = vmatprep.mubr.f32.mxu0 0.0
        %v1080 = vand.u32 %v765, 4294901760
        %v1081 = vsub.f32 %v765, %v1080
        %v1082 = vand.u32 %v1081, 4294901760
        %1083 = vmatmul.mubr.f32.gmra.mrb[0].mxu0 %v1082
        %v1084 = vpop.f32.mrb[0].mxu0
        %v1085 = vadd.f32 %v1004, %v1084
        %v1086 = vpop.f32.mrb[0].mxu0
        %1087 = vdwg.mxu0
        %1088 = vmatprep.subr.mxu0 0.0
        %1089 = vmatpush1.msra.mxu0 0.0
        %1090 = vmatprep.subr.mxu0 0.0
        %1091 = vmatpush1.msra.mxu0 0.0
        %1092 = vmatprep.subr.mxu0 0.0
        %1093 = vmatpush1.msra.mxu0 0.0
        %1094 = vmatprep.subr.mxu0 0.0
        %1095 = vmatpush1.msra.mxu0 0.0
        %1096 = vmatprep.subr.mxu0 0.0
        %1097 = vmatpush1.msra.mxu0 0.0
        %1098 = vmatprep.subr.mxu0 0.0
        %1099 = vmatpush1.msra.mxu0 0.0
        %1100 = vmatprep.subr.mxu0 0.0
        %1101 = vmatpush1.msra.mxu0 0.0
        %1102 = vmatprep.subr.mxu0 0.0
        %1103 = vmatpush1.msra.mxu0 0.0
        %1104 = vmatprep.subr.mxu0 0.0
        %1105 = vmatpush1.msra.mxu0 0.0
        %1106 = vmatprep.subr.mxu0 0.0
        %1107 = vmatpush1.msra.mxu0 0.0
        %1108 = vmatprep.subr.mxu0 0.0
        %1109 = vmatpush1.msra.mxu0 0.0
        %1110 = vmatprep.subr.mxu0 0.0
        %1111 = vmatpush1.msra.mxu0 0.0
        %1112 = vmatprep.subr.mxu0 0.0
        %1113 = vmatpush1.msra.mxu0 0.0
        %1114 = vmatprep.subr.mxu0 0.0
        %1115 = vmatpush1.msra.mxu0 0.0
        %1116 = vmatprep.subr.mxu0 0.0
        %1117 = vmatpush1.msra.mxu0 0.0
        %1118 = vmatprep.subr.mxu0 0.0
        %1119 = vmatpush1.msra.mxu0 0.0
        %1120 = vmatprep.subr.mxu0 0.0
        %1121 = vmatpush1.msra.mxu0 0.0
        %1122 = vmatprep.subr.mxu0 0.0
        %1123 = vmatpush1.msra.mxu0 0.0
        %1124 = vmatprep.subr.mxu0 0.0
        %1125 = vmatpush1.msra.mxu0 0.0
        %1126 = vmatprep.subr.mxu0 0.0
        %1127 = vmatpush1.msra.mxu0 0.0
        %1128 = vmatprep.subr.mxu0 0.0
        %1129 = vmatpush1.msra.mxu0 0.0
        %1130 = vmatprep.subr.mxu0 0.0
        %1131 = vmatpush1.msra.mxu0 0.0
        %1132 = vmatprep.subr.mxu0 0.0
        %1133 = vmatpush1.msra.mxu0 0.0
        %1134 = vmatprep.subr.mxu0 0.0
        %1135 = vmatpush1.msra.mxu0 0.0
        %1136 = vmatprep.subr.mxu0 0.0
        %1137 = vmatpush1.msra.mxu0 0.0
        %1138 = vmatprep.subr.mxu0 0.0
        %1139 = vmatpush1.msra.mxu0 0.0
        %1140 = vmatprep.subr.mxu0 0.0
        %1141 = vmatpush1.msra.mxu0 0.0
        %1142 = vmatprep.subr.mxu0 0.0
        %1143 = vmatpush1.msra.mxu0 0.0
        %1144 = vmatprep.subr.mxu0 0.0
        %1145 = vmatpush1.msra.mxu0 0.0
        %1146 = vmatprep.subr.mxu0 0.0
        %1147 = vmatpush1.msra.mxu0 0.0
        %1148 = vmatprep.subr.mxu0 0.0
        %1149 = vmatpush1.msra.mxu0 0.0
        %1150 = vmatprep.subr.mxu0 0.0
        %1151 = vmatpush1.msra.mxu0 0.0
        %1152 = vmatprep.mubr.f32.mxu0 0.0
        %v1153 = vand.u32 %v764, 4294901760
        %1154 = vmatmul.mubr.f32.gmra.mrb[0].mxu0 %v1153
        %v1155 = vpop.f32.mrb[0].mxu0
        %v1156 = vadd.f32 %v1077, %v1155
        %v1157 = vpop.f32.mrb[0].mxu0
        %1158 = vmatprep.mubr.f32.mxu0 0.0
        %v1159 = vand.u32 %v765, 4294901760
        %1160 = vmatmul.mubr.f32.gmra.mrb[0].mxu0 %v1159
        %v1161 = vpop.f32.mrb[0].mxu0
        %v1162 = vadd.f32 %v1085, %v1161
        %v1163 = vpop.f32.mrb[0].mxu0
        %1164 = vdwg.mxu0
        %1165 = vmatprep.subr.mxu0 0.0
        %1166 = vmatpush1.msra.mxu0 1.0
        %1167 = vmatprep.subr.mxu0 0.0
        %1168 = vmatpush1.msra.mxu0 1.0
        %1169 = vmatprep.subr.mxu0 0.0
        %1170 = vmatpush1.msra.mxu0 1.0
        %1171 = vmatprep.subr.mxu0 0.0
        %1172 = vmatpush1.msra.mxu0 1.0
        %1173 = vmatprep.subr.mxu0 0.0
        %1174 = vmatpush1.msra.mxu0 1.0
        %1175 = vmatprep.subr.mxu0 0.0
        %1176 = vmatpush1.msra.mxu0 1.0
        %1177 = vmatprep.subr.mxu0 0.0
        %1178 = vmatpush1.msra.mxu0 1.0
        %1179 = vmatprep.subr.mxu0 0.0
        %1180 = vmatpush1.msra.mxu0 1.0
        %1181 = vmatprep.subr.mxu0 0.0
        %1182 = vmatpush1.msra.mxu0 1.0
        %1183 = vmatprep.subr.mxu0 0.0
        %1184 = vmatpush1.msra.mxu0 1.0
        %1185 = vmatprep.subr.mxu0 0.0
        %1186 = vmatpush1.msra.mxu0 1.0
        %1187 = vmatprep.subr.mxu0 0.0
        %1188 = vmatpush1.msra.mxu0 1.0
        %1189 = vmatprep.subr.mxu0 0.0
        %1190 = vmatpush1.msra.mxu0 1.0
        %1191 = vmatprep.subr.mxu0 0.0
        %1192 = vmatpush1.msra.mxu0 1.0
        %1193 = vmatprep.subr.mxu0 0.0
        %1194 = vmatpush1.msra.mxu0 1.0
        %1195 = vmatprep.subr.mxu0 0.0
        %1196 = vmatpush1.msra.mxu0 1.0
        %1197 = vmatprep.subr.mxu0 0.0
        %1198 = vmatpush1.msra.mxu0 0.0
        %1199 = vmatprep.subr.mxu0 0.0
        %1200 = vmatpush1.msra.mxu0 0.0
        %1201 = vmatprep.subr.mxu0 0.0
        %1202 = vmatpush1.msra.mxu0 0.0
        %1203 = vmatprep.subr.mxu0 0.0
        %1204 = vmatpush1.msra.mxu0 0.0
        %1205 = vmatprep.subr.mxu0 0.0
        %1206 = vmatpush1.msra.mxu0 0.0
        %1207 = vmatprep.subr.mxu0 0.0
        %1208 = vmatpush1.msra.mxu0 0.0
        %1209 = vmatprep.subr.mxu0 0.0
        %1210 = vmatpush1.msra.mxu0 0.0
        %1211 = vmatprep.subr.mxu0 0.0
        %1212 = vmatpush1.msra.mxu0 0.0
        %1213 = vmatprep.subr.mxu0 0.0
        %1214 = vmatpush1.msra.mxu0 0.0
        %1215 = vmatprep.subr.mxu0 0.0
        %1216 = vmatpush1.msra.mxu0 0.0
        %1217 = vmatprep.subr.mxu0 0.0
        %1218 = vmatpush1.msra.mxu0 0.0
        %1219 = vmatprep.subr.mxu0 0.0
        %1220 = vmatpush1.msra.mxu0 0.0
        %1221 = vmatprep.subr.mxu0 0.0
        %1222 = vmatpush1.msra.mxu0 0.0
        %1223 = vmatprep.subr.mxu0 0.0
        %1224 = vmatpush1.msra.mxu0 0.0
        %1225 = vmatprep.subr.mxu0 0.0
        %1226 = vmatpush1.msra.mxu0 0.0
        %1227 = vmatprep.subr.mxu0 0.0
        %1228 = vmatpush1.msra.mxu0 0.0
        %1229 = vmatprep.mubr.f32.mxu0 0.0
        %v1230 = vand.u32 %v764, 4294901760
        %1231 = vmatmul.mubr.f32.gmra.mrb[0].mxu0 %v1230
        %v1232 = vpop.f32.mrb[0].mxu0
        %v1233 = vadd.f32 %v1156, %v1232
        %v1234 = vpop.f32.mrb[0].mxu0
        %1235 = vmatprep.mubr.f32.mxu0 0.0
        %v1236 = vand.u32 %v765, 4294901760
        %1237 = vmatmul.mubr.f32.gmra.mrb[0].mxu0 %v1236
        %v1238 = vpop.f32.mrb[0].mxu0
        %v1239 = vadd.f32 %v1162, %v1238
        %v1240 = vpop.f32.mrb[0].mxu0
        %1241 = vdwg.mxu0
        %v1242 = vld [vmem:[%s246] sm:$0xff]
        %v1243 = vld [vmem:[%s246 + $0x8] sm:$0xff]
        %v1244 = vand.u32 2147483647, %v1242
        %v1245 = vand.u32 2147483647, %v1243
        %1246 = vmatprep.subr.mxu0 0.0
        %1247 = vmatpush1.msra.mxu0 1.0
        %1248 = vmatprep.subr.mxu0 0.0
        %1249 = vmatpush1.msra.mxu0 1.0
        %1250 = vmatprep.subr.mxu0 0.0
        %1251 = vmatpush1.msra.mxu0 1.0
        %1252 = vmatprep.subr.mxu0 0.0
        %1253 = vmatpush1.msra.mxu0 1.0
        %1254 = vmatprep.subr.mxu0 0.0
        %1255 = vmatpush1.msra.mxu0 1.0
        %1256 = vmatprep.subr.mxu0 0.0
        %1257 = vmatpush1.msra.mxu0 1.0
        %1258 = vmatprep.subr.mxu0 0.0
        %1259 = vmatpush1.msra.mxu0 1.0
        %1260 = vmatprep.subr.mxu0 0.0
        %1261 = vmatpush1.msra.mxu0 1.0
        %1262 = vmatprep.subr.mxu0 0.0
        %1263 = vmatpush1.msra.mxu0 1.0
        %1264 = vmatprep.subr.mxu0 0.0
        %1265 = vmatpush1.msra.mxu0 1.0
        %1266 = vmatprep.subr.mxu0 0.0
        %1267 = vmatpush1.msra.mxu0 1.0
        %1268 = vmatprep.subr.mxu0 0.0
        %1269 = vmatpush1.msra.mxu0 1.0
        %1270 = vmatprep.subr.mxu0 0.0
        %1271 = vmatpush1.msra.mxu0 1.0
        %1272 = vmatprep.subr.mxu0 0.0
        %1273 = vmatpush1.msra.mxu0 1.0
        %1274 = vmatprep.subr.mxu0 0.0
        %1275 = vmatpush1.msra.mxu0 1.0
        %1276 = vmatprep.subr.mxu0 0.0
        %1277 = vmatpush1.msra.mxu0 1.0
        %1278 = vmatprep.subr.mxu0 0.0
        %1279 = vmatpush1.msra.mxu0 0.0
        %1280 = vmatprep.subr.mxu0 0.0
        %1281 = vmatpush1.msra.mxu0 0.0
        %1282 = vmatprep.subr.mxu0 0.0
        %1283 = vmatpush1.msra.mxu0 0.0
        %1284 = vmatprep.subr.mxu0 0.0
        %1285 = vmatpush1.msra.mxu0 0.0
        %1286 = vmatprep.subr.mxu0 0.0
        %1287 = vmatpush1.msra.mxu0 0.0
        %1288 = vmatprep.subr.mxu0 0.0
        %1289 = vmatpush1.msra.mxu0 0.0
        %1290 = vmatprep.subr.mxu0 0.0
        %1291 = vmatpush1.msra.mxu0 0.0
        %1292 = vmatprep.subr.mxu0 0.0
        %1293 = vmatpush1.msra.mxu0 0.0
        %1294 = vmatprep.subr.mxu0 0.0
        %1295 = vmatpush1.msra.mxu0 0.0
        %1296 = vmatprep.subr.mxu0 0.0
        %1297 = vmatpush1.msra.mxu0 0.0
        %1298 = vmatprep.subr.mxu0 0.0
        %1299 = vmatpush1.msra.mxu0 0.0
        %1300 = vmatprep.subr.mxu0 0.0
        %1301 = vmatpush1.msra.mxu0 0.0
        %1302 = vmatprep.subr.mxu0 0.0
        %1303 = vmatpush1.msra.mxu0 0.0
        %1304 = vmatprep.subr.mxu0 0.0
        %1305 = vmatpush1.msra.mxu0 0.0
        %1306 = vmatprep.subr.mxu0 0.0
        %1307 = vmatpush1.msra.mxu0 0.0
        %1308 = vmatprep.subr.mxu0 0.0
        %1309 = vmatpush1.msra.mxu0 0.0
        %1310 = vmatprep.mubr.f32.mxu0 0.0
        %v1311 = vand.u32 %v1244, 4294901760
        %v1312 = vsub.f32 %v1244, %v1311
        %v1313 = vand.u32 %v1312, 4294901760
        %v1314 = vsub.f32 %v1312, %v1313
        %v1315 = vand.u32 %v1314, 4294901760
        %1316 = vmatmul.mubr.f32.gmra.mrb[0].mxu0 %v1315
        %v1317 = vpop.f32.mrb[0].mxu0
        %v1318 = vadd.f32 0.0, %v1317
        %v1319 = vpop.f32.mrb[0].mxu0
        %1320 = vmatprep.mubr.f32.mxu0 0.0
        %v1321 = vand.u32 %v1245, 4294901760
        %v1322 = vsub.f32 %v1245, %v1321
        %v1323 = vand.u32 %v1322, 4294901760
        %v1324 = vsub.f32 %v1322, %v1323
        %v1325 = vand.u32 %v1324, 4294901760
        %1326 = vmatmul.mubr.f32.gmra.mrb[0].mxu0 %v1325
        %v1327 = vpop.f32.mrb[0].mxu0
        %v1328 = vadd.f32 0.0, %v1327
        %v1329 = vpop.f32.mrb[0].mxu0
        %1330 = vdwg.mxu0
        %1331 = vmatprep.subr.mxu0 0.0
        %1332 = vmatpush1.msra.mxu0 0.0
        %1333 = vmatprep.subr.mxu0 0.0
        %1334 = vmatpush1.msra.mxu0 0.0
        %1335 = vmatprep.subr.mxu0 0.0
        %1336 = vmatpush1.msra.mxu0 0.0
        %1337 = vmatprep.subr.mxu0 0.0
        %1338 = vmatpush1.msra.mxu0 0.0
        %1339 = vmatprep.subr.mxu0 0.0
        %1340 = vmatpush1.msra.mxu0 0.0
        %1341 = vmatprep.subr.mxu0 0.0
        %1342 = vmatpush1.msra.mxu0 0.0
        %1343 = vmatprep.subr.mxu0 0.0
        %1344 = vmatpush1.msra.mxu0 0.0
        %1345 = vmatprep.subr.mxu0 0.0
        %1346 = vmatpush1.msra.mxu0 0.0
        %1347 = vmatprep.subr.mxu0 0.0
        %1348 = vmatpush1.msra.mxu0 0.0
        %1349 = vmatprep.subr.mxu0 0.0
        %1350 = vmatpush1.msra.mxu0 0.0
        %1351 = vmatprep.subr.mxu0 0.0
        %1352 = vmatpush1.msra.mxu0 0.0
        %1353 = vmatprep.subr.mxu0 0.0
        %1354 = vmatpush1.msra.mxu0 0.0
        %1355 = vmatprep.subr.mxu0 0.0
        %1356 = vmatpush1.msra.mxu0 0.0
        %1357 = vmatprep.subr.mxu0 0.0
        %1358 = vmatpush1.msra.mxu0 0.0
        %1359 = vmatprep.subr.mxu0 0.0
        %1360 = vmatpush1.msra.mxu0 0.0
        %1361 = vmatprep.subr.mxu0 0.0
        %1362 = vmatpush1.msra.mxu0 0.0
        %1363 = vmatprep.subr.mxu0 0.0
        %1364 = vmatpush1.msra.mxu0 0.0
        %1365 = vmatprep.subr.mxu0 0.0
        %1366 = vmatpush1.msra.mxu0 0.0
        %1367 = vmatprep.subr.mxu0 0.0
        %1368 = vmatpush1.msra.mxu0 0.0
        %1369 = vmatprep.subr.mxu0 0.0
        %1370 = vmatpush1.msra.mxu0 0.0
        %1371 = vmatprep.subr.mxu0 0.0
        %1372 = vmatpush1.msra.mxu0 0.0
        %1373 = vmatprep.subr.mxu0 0.0
        %1374 = vmatpush1.msra.mxu0 0.0
        %1375 = vmatprep.subr.mxu0 0.0
        %1376 = vmatpush1.msra.mxu0 0.0
        %1377 = vmatprep.subr.mxu0 0.0
        %1378 = vmatpush1.msra.mxu0 0.0
        %1379 = vmatprep.subr.mxu0 0.0
        %1380 = vmatpush1.msra.mxu0 0.0
        %1381 = vmatprep.subr.mxu0 0.0
        %1382 = vmatpush1.msra.mxu0 0.0
        %1383 = vmatprep.subr.mxu0 0.0
        %1384 = vmatpush1.msra.mxu0 0.0
        %1385 = vmatprep.subr.mxu0 0.0
        %1386 = vmatpush1.msra.mxu0 0.0
        %1387 = vmatprep.subr.mxu0 0.0
        %1388 = vmatpush1.msra.mxu0 0.0
        %1389 = vmatprep.subr.mxu0 0.0
        %1390 = vmatpush1.msra.mxu0 0.0
        %1391 = vmatprep.subr.mxu0 0.0
        %1392 = vmatpush1.msra.mxu0 0.0
        %1393 = vmatprep.subr.mxu0 0.0
        %1394 = vmatpush1.msra.mxu0 0.0
        %1395 = vmatprep.mubr.f32.mxu0 0.0
        %v1396 = vand.u32 %v1244, 4294901760
        %1397 = vmatmul.mubr.f32.gmra.mrb[0].mxu0 %v1396
        %v1398 = vpop.f32.mrb[0].mxu0
        %v1399 = vadd.f32 %v1318, %v1398
        %v1400 = vpop.f32.mrb[0].mxu0
        %1401 = vmatprep.mubr.f32.mxu0 0.0
        %v1402 = vand.u32 %v1245, 4294901760
        %1403 = vmatmul.mubr.f32.gmra.mrb[0].mxu0 %v1402
        %v1404 = vpop.f32.mrb[0].mxu0
        %v1405 = vadd.f32 %v1328, %v1404
        %v1406 = vpop.f32.mrb[0].mxu0
        %1407 = vdwg.mxu0
        %1408 = vmatprep.subr.mxu0 0.0
        %1409 = vmatpush1.msra.mxu0 0.0
        %1410 = vmatprep.subr.mxu0 0.0
        %1411 = vmatpush1.msra.mxu0 0.0
        %1412 = vmatprep.subr.mxu0 0.0
        %1413 = vmatpush1.msra.mxu0 0.0
        %1414 = vmatprep.subr.mxu0 0.0
        %1415 = vmatpush1.msra.mxu0 0.0
        %1416 = vmatprep.subr.mxu0 0.0
        %1417 = vmatpush1.msra.mxu0 0.0
        %1418 = vmatprep.subr.mxu0 0.0
        %1419 = vmatpush1.msra.mxu0 0.0
        %1420 = vmatprep.subr.mxu0 0.0
        %1421 = vmatpush1.msra.mxu0 0.0
        %1422 = vmatprep.subr.mxu0 0.0
        %1423 = vmatpush1.msra.mxu0 0.0
        %1424 = vmatprep.subr.mxu0 0.0
        %1425 = vmatpush1.msra.mxu0 0.0
        %1426 = vmatprep.subr.mxu0 0.0
        %1427 = vmatpush1.msra.mxu0 0.0
        %1428 = vmatprep.subr.mxu0 0.0
        %1429 = vmatpush1.msra.mxu0 0.0
        %1430 = vmatprep.subr.mxu0 0.0
        %1431 = vmatpush1.msra.mxu0 0.0
        %1432 = vmatprep.subr.mxu0 0.0
        %1433 = vmatpush1.msra.mxu0 0.0
        %1434 = vmatprep.subr.mxu0 0.0
        %1435 = vmatpush1.msra.mxu0 0.0
        %1436 = vmatprep.subr.mxu0 0.0
        %1437 = vmatpush1.msra.mxu0 0.0
        %1438 = vmatprep.subr.mxu0 0.0
        %1439 = vmatpush1.msra.mxu0 0.0
        %1440 = vmatprep.subr.mxu0 0.0
        %1441 = vmatpush1.msra.mxu0 0.0
        %1442 = vmatprep.subr.mxu0 0.0
        %1443 = vmatpush1.msra.mxu0 0.0
        %1444 = vmatprep.subr.mxu0 0.0
        %1445 = vmatpush1.msra.mxu0 0.0
        %1446 = vmatprep.subr.mxu0 0.0
        %1447 = vmatpush1.msra.mxu0 0.0
        %1448 = vmatprep.subr.mxu0 0.0
        %1449 = vmatpush1.msra.mxu0 0.0
        %1450 = vmatprep.subr.mxu0 0.0
        %1451 = vmatpush1.msra.mxu0 0.0
        %1452 = vmatprep.subr.mxu0 0.0
        %1453 = vmatpush1.msra.mxu0 0.0
        %1454 = vmatprep.subr.mxu0 0.0
        %1455 = vmatpush1.msra.mxu0 0.0
        %1456 = vmatprep.subr.mxu0 0.0
        %1457 = vmatpush1.msra.mxu0 0.0
        %1458 = vmatprep.subr.mxu0 0.0
        %1459 = vmatpush1.msra.mxu0 0.0
        %1460 = vmatprep.subr.mxu0 0.0
        %1461 = vmatpush1.msra.mxu0 0.0
        %1462 = vmatprep.subr.mxu0 0.0
        %1463 = vmatpush1.msra.mxu0 0.0
        %1464 = vmatprep.subr.mxu0 0.0
        %1465 = vmatpush1.msra.mxu0 0.0
        %1466 = vmatprep.subr.mxu0 0.0
        %1467 = vmatpush1.msra.mxu0 0.0
        %1468 = vmatprep.subr.mxu0 0.0
        %1469 = vmatpush1.msra.mxu0 0.0
        %1470 = vmatprep.subr.mxu0 0.0
        %1471 = vmatpush1.msra.mxu0 0.0
        %1472 = vmatprep.mubr.f32.mxu0 0.0
        %v1473 = vand.u32 %v1244, 4294901760
        %v1474 = vsub.f32 %v1244, %v1473
        %1475 = vmatmul.mubr.f32.gmra.mrb[0].mxu0 %v1474
        %v1476 = vpop.f32.mrb[0].mxu0
        %v1477 = vadd.f32 %v1399, %v1476
        %v1478 = vpop.f32.mrb[0].mxu0
        %1479 = vmatprep.mubr.f32.mxu0 0.0
        %v1480 = vand.u32 %v1245, 4294901760
        %v1481 = vsub.f32 %v1245, %v1480
        %1482 = vmatmul.mubr.f32.gmra.mrb[0].mxu0 %v1481
        %v1483 = vpop.f32.mrb[0].mxu0
        %v1484 = vadd.f32 %v1405, %v1483
        %v1485 = vpop.f32.mrb[0].mxu0
        %1486 = vdwg.mxu0
        %1487 = vmatprep.subr.mxu0 0.0
        %1488 = vmatpush1.msra.mxu0 1.0
        %1489 = vmatprep.subr.mxu0 0.0
        %1490 = vmatpush1.msra.mxu0 1.0
        %1491 = vmatprep.subr.mxu0 0.0
        %1492 = vmatpush1.msra.mxu0 1.0
        %1493 = vmatprep.subr.mxu0 0.0
        %1494 = vmatpush1.msra.mxu0 1.0
        %1495 = vmatprep.subr.mxu0 0.0
        %1496 = vmatpush1.msra.mxu0 1.0
        %1497 = vmatprep.subr.mxu0 0.0
        %1498 = vmatpush1.msra.mxu0 1.0
        %1499 = vmatprep.subr.mxu0 0.0
        %1500 = vmatpush1.msra.mxu0 1.0
        %1501 = vmatprep.subr.mxu0 0.0
        %1502 = vmatpush1.msra.mxu0 1.0
        %1503 = vmatprep.subr.mxu0 0.0
        %1504 = vmatpush1.msra.mxu0 1.0
        %1505 = vmatprep.subr.mxu0 0.0
        %1506 = vmatpush1.msra.mxu0 1.0
        %1507 = vmatprep.subr.mxu0 0.0
        %1508 = vmatpush1.msra.mxu0 1.0
        %1509 = vmatprep.subr.mxu0 0.0
        %1510 = vmatpush1.msra.mxu0 1.0
        %1511 = vmatprep.subr.mxu0 0.0
        %1512 = vmatpush1.msra.mxu0 1.0
        %1513 = vmatprep.subr.mxu0 0.0
        %1514 = vmatpush1.msra.mxu0 1.0
        %1515 = vmatprep.subr.mxu0 0.0
        %1516 = vmatpush1.msra.mxu0 1.0
        %1517 = vmatprep.subr.mxu0 0.0
        %1518 = vmatpush1.msra.mxu0 1.0
        %1519 = vmatprep.subr.mxu0 0.0
        %1520 = vmatpush1.msra.mxu0 0.0
        %1521 = vmatprep.subr.mxu0 0.0
        %1522 = vmatpush1.msra.mxu0 0.0
        %1523 = vmatprep.subr.mxu0 0.0
        %1524 = vmatpush1.msra.mxu0 0.0
        %1525 = vmatprep.subr.mxu0 0.0
        %1526 = vmatpush1.msra.mxu0 0.0
        %1527 = vmatprep.subr.mxu0 0.0
        %1528 = vmatpush1.msra.mxu0 0.0
        %1529 = vmatprep.subr.mxu0 0.0
        %1530 = vmatpush1.msra.mxu0 0.0
        %1531 = vmatprep.subr.mxu0 0.0
        %1532 = vmatpush1.msra.mxu0 0.0
        %1533 = vmatprep.subr.mxu0 0.0
        %1534 = vmatpush1.msra.mxu0 0.0
        %1535 = vmatprep.subr.mxu0 0.0
        %1536 = vmatpush1.msra.mxu0 0.0
        %1537 = vmatprep.subr.mxu0 0.0
        %1538 = vmatpush1.msra.mxu0 0.0
        %1539 = vmatprep.subr.mxu0 0.0
        %1540 = vmatpush1.msra.mxu0 0.0
        %1541 = vmatprep.subr.mxu0 0.0
        %1542 = vmatpush1.msra.mxu0 0.0
        %1543 = vmatprep.subr.mxu0 0.0
        %1544 = vmatpush1.msra.mxu0 0.0
        %1545 = vmatprep.subr.mxu0 0.0
        %1546 = vmatpush1.msra.mxu0 0.0
        %1547 = vmatprep.subr.mxu0 0.0
        %1548 = vmatpush1.msra.mxu0 0.0
        %1549 = vmatprep.subr.mxu0 0.0
        %1550 = vmatpush1.msra.mxu0 0.0
        %1551 = vmatprep.mubr.f32.mxu0 0.0
        %v1552 = vand.u32 %v1244, 4294901760
        %v1553 = vsub.f32 %v1244, %v1552
        %v1554 = vand.u32 %v1553, 4294901760
        %1555 = vmatmul.mubr.f32.gmra.mrb[0].mxu0 %v1554
        %v1556 = vpop.f32.mrb[0].mxu0
        %v1557 = vadd.f32 %v1477, %v1556
        %v1558 = vpop.f32.mrb[0].mxu0
        %1559 = vmatprep.mubr.f32.mxu0 0.0
        %v1560 = vand.u32 %v1245, 4294901760
        %v1561 = vsub.f32 %v1245, %v1560
        %v1562 = vand.u32 %v1561, 4294901760
        %1563 = vmatmul.mubr.f32.gmra.mrb[0].mxu0 %v1562
        %v1564 = vpop.f32.mrb[0].mxu0
        %v1565 = vadd.f32 %v1484, %v1564
        %v1566 = vpop.f32.mrb[0].mxu0
        %1567 = vdwg.mxu0
        %1568 = vmatprep.subr.mxu0 0.0
        %1569 = vmatpush1.msra.mxu0 0.0
        %1570 = vmatprep.subr.mxu0 0.0
        %1571 = vmatpush1.msra.mxu0 0.0
        %1572 = vmatprep.subr.mxu0 0.0
        %1573 = vmatpush1.msra.mxu0 0.0
        %1574 = vmatprep.subr.mxu0 0.0
        %1575 = vmatpush1.msra.mxu0 0.0
        %1576 = vmatprep.subr.mxu0 0.0
        %1577 = vmatpush1.msra.mxu0 0.0
        %1578 = vmatprep.subr.mxu0 0.0
        %1579 = vmatpush1.msra.mxu0 0.0
        %1580 = vmatprep.subr.mxu0 0.0
        %1581 = vmatpush1.msra.mxu0 0.0
        %1582 = vmatprep.subr.mxu0 0.0
        %1583 = vmatpush1.msra.mxu0 0.0
        %1584 = vmatprep.subr.mxu0 0.0
        %1585 = vmatpush1.msra.mxu0 0.0
        %1586 = vmatprep.subr.mxu0 0.0
        %1587 = vmatpush1.msra.mxu0 0.0
        %1588 = vmatprep.subr.mxu0 0.0
        %1589 = vmatpush1.msra.mxu0 0.0
        %1590 = vmatprep.subr.mxu0 0.0
        %1591 = vmatpush1.msra.mxu0 0.0
        %1592 = vmatprep.subr.mxu0 0.0
        %1593 = vmatpush1.msra.mxu0 0.0
        %1594 = vmatprep.subr.mxu0 0.0
        %1595 = vmatpush1.msra.mxu0 0.0
        %1596 = vmatprep.subr.mxu0 0.0
        %1597 = vmatpush1.msra.mxu0 0.0
        %1598 = vmatprep.subr.mxu0 0.0
        %1599 = vmatpush1.msra.mxu0 0.0
        %1600 = vmatprep.subr.mxu0 0.0
        %1601 = vmatpush1.msra.mxu0 0.0
        %1602 = vmatprep.subr.mxu0 0.0
        %1603 = vmatpush1.msra.mxu0 0.0
        %1604 = vmatprep.subr.mxu0 0.0
        %1605 = vmatpush1.msra.mxu0 0.0
        %1606 = vmatprep.subr.mxu0 0.0
        %1607 = vmatpush1.msra.mxu0 0.0
        %1608 = vmatprep.subr.mxu0 0.0
        %1609 = vmatpush1.msra.mxu0 0.0
        %1610 = vmatprep.subr.mxu0 0.0
        %1611 = vmatpush1.msra.mxu0 0.0
        %1612 = vmatprep.subr.mxu0 0.0
        %1613 = vmatpush1.msra.mxu0 0.0
        %1614 = vmatprep.subr.mxu0 0.0
        %1615 = vmatpush1.msra.mxu0 0.0
        %1616 = vmatprep.subr.mxu0 0.0
        %1617 = vmatpush1.msra.mxu0 0.0
        %1618 = vmatprep.subr.mxu0 0.0
        %1619 = vmatpush1.msra.mxu0 0.0
        %1620 = vmatprep.subr.mxu0 0.0
        %1621 = vmatpush1.msra.mxu0 0.0
        %1622 = vmatprep.subr.mxu0 0.0
        %1623 = vmatpush1.msra.mxu0 0.0
        %1624 = vmatprep.subr.mxu0 0.0
        %1625 = vmatpush1.msra.mxu0 0.0
        %1626 = vmatprep.subr.mxu0 0.0
        %1627 = vmatpush1.msra.mxu0 0.0
        %1628 = vmatprep.subr.mxu0 0.0
        %1629 = vmatpush1.msra.mxu0 0.0
        %1630 = vmatprep.subr.mxu0 0.0
        %1631 = vmatpush1.msra.mxu0 0.0
        %1632 = vmatprep.mubr.f32.mxu0 0.0
        %v1633 = vand.u32 %v1244, 4294901760
        %1634 = vmatmul.mubr.f32.gmra.mrb[0].mxu0 %v1633
        %v1635 = vpop.f32.mrb[0].mxu0
        %v1636 = vadd.f32 %v1557, %v1635
        %v1637 = vpop.f32.mrb[0].mxu0
        %1638 = vmatprep.mubr.f32.mxu0 0.0
        %v1639 = vand.u32 %v1245, 4294901760
        %1640 = vmatmul.mubr.f32.gmra.mrb[0].mxu0 %v1639
        %v1641 = vpop.f32.mrb[0].mxu0
        %v1642 = vadd.f32 %v1565, %v1641
        %v1643 = vpop.f32.mrb[0].mxu0
        %1644 = vdwg.mxu0
        %1645 = vmatprep.subr.mxu0 0.0
        %1646 = vmatpush1.msra.mxu0 1.0
        %1647 = vmatprep.subr.mxu0 0.0
        %1648 = vmatpush1.msra.mxu0 1.0
        %1649 = vmatprep.subr.mxu0 0.0
        %1650 = vmatpush1.msra.mxu0 1.0
        %1651 = vmatprep.subr.mxu0 0.0
        %1652 = vmatpush1.msra.mxu0 1.0
        %1653 = vmatprep.subr.mxu0 0.0
        %1654 = vmatpush1.msra.mxu0 1.0
        %1655 = vmatprep.subr.mxu0 0.0
        %1656 = vmatpush1.msra.mxu0 1.0
        %1657 = vmatprep.subr.mxu0 0.0
        %1658 = vmatpush1.msra.mxu0 1.0
        %1659 = vmatprep.subr.mxu0 0.0
        %1660 = vmatpush1.msra.mxu0 1.0
        %1661 = vmatprep.subr.mxu0 0.0
        %1662 = vmatpush1.msra.mxu0 1.0
        %1663 = vmatprep.subr.mxu0 0.0
        %1664 = vmatpush1.msra.mxu0 1.0
        %1665 = vmatprep.subr.mxu0 0.0
        %1666 = vmatpush1.msra.mxu0 1.0
        %1667 = vmatprep.subr.mxu0 0.0
        %1668 = vmatpush1.msra.mxu0 1.0
        %1669 = vmatprep.subr.mxu0 0.0
        %1670 = vmatpush1.msra.mxu0 1.0
        %1671 = vmatprep.subr.mxu0 0.0
        %1672 = vmatpush1.msra.mxu0 1.0
        %1673 = vmatprep.subr.mxu0 0.0
        %1674 = vmatpush1.msra.mxu0 1.0
        %1675 = vmatprep.subr.mxu0 0.0
        %1676 = vmatpush1.msra.mxu0 1.0
        %1677 = vmatprep.subr.mxu0 0.0
        %1678 = vmatpush1.msra.mxu0 0.0
        %1679 = vmatprep.subr.mxu0 0.0
        %1680 = vmatpush1.msra.mxu0 0.0
        %1681 = vmatprep.subr.mxu0 0.0
        %1682 = vmatpush1.msra.mxu0 0.0
        %1683 = vmatprep.subr.mxu0 0.0
        %1684 = vmatpush1.msra.mxu0 0.0
        %1685 = vmatprep.subr.mxu0 0.0
        %1686 = vmatpush1.msra.mxu0 0.0
        %1687 = vmatprep.subr.mxu0 0.0
        %1688 = vmatpush1.msra.mxu0 0.0
        %1689 = vmatprep.subr.mxu0 0.0
        %1690 = vmatpush1.msra.mxu0 0.0
        %1691 = vmatprep.subr.mxu0 0.0
        %1692 = vmatpush1.msra.mxu0 0.0
        %1693 = vmatprep.subr.mxu0 0.0
        %1694 = vmatpush1.msra.mxu0 0.0
        %1695 = vmatprep.subr.mxu0 0.0
        %1696 = vmatpush1.msra.mxu0 0.0
        %1697 = vmatprep.subr.mxu0 0.0
        %1698 = vmatpush1.msra.mxu0 0.0
        %1699 = vmatprep.subr.mxu0 0.0
        %1700 = vmatpush1.msra.mxu0 0.0
        %1701 = vmatprep.subr.mxu0 0.0
        %1702 = vmatpush1.msra.mxu0 0.0
        %1703 = vmatprep.subr.mxu0 0.0
        %1704 = vmatpush1.msra.mxu0 0.0
        %1705 = vmatprep.subr.mxu0 0.0
        %1706 = vmatpush1.msra.mxu0 0.0
        %1707 = vmatprep.subr.mxu0 0.0
        %1708 = vmatpush1.msra.mxu0 0.0
        %1709 = vmatprep.mubr.f32.mxu0 0.0
        %v1710 = vand.u32 %v1244, 4294901760
        %1711 = vmatmul.mubr.f32.gmra.mrb[0].mxu0 %v1710
        %v1712 = vpop.f32.mrb[0].mxu0
        %v1713 = vadd.f32 %v1636, %v1712
        %v1714 = vpop.f32.mrb[0].mxu0
        %1715 = vmatprep.mubr.f32.mxu0 0.0
        %v1716 = vand.u32 %v1245, 4294901760
        %1717 = vmatmul.mubr.f32.gmra.mrb[0].mxu0 %v1716
        %v1718 = vpop.f32.mrb[0].mxu0
        %v1719 = vadd.f32 %v1642, %v1718
        %v1720 = vpop.f32.mrb[0].mxu0
        %1721 = vdwg.mxu0
        %s1722 = scalar_lea.vmem %s246, 16 [#allocation9]
        %v1723 = vld [vmem:[%s1722] sm:$0xff]
        %v1724 = vld [vmem:[%s1722 + $0x8] sm:$0xff]
        %v1725 = vand.u32 2147483647, %v1723
        %v1726 = vand.u32 2147483647, %v1724
        %1727 = vmatprep.subr.mxu0 0.0
        %1728 = vmatpush1.msra.mxu0 1.0
        %1729 = vmatprep.subr.mxu0 0.0
        %1730 = vmatpush1.msra.mxu0 1.0
        %1731 = vmatprep.subr.mxu0 0.0
        %1732 = vmatpush1.msra.mxu0 1.0
        %1733 = vmatprep.subr.mxu0 0.0
        %1734 = vmatpush1.msra.mxu0 1.0
        %1735 = vmatprep.subr.mxu0 0.0
        %1736 = vmatpush1.msra.mxu0 1.0
        %1737 = vmatprep.subr.mxu0 0.0
        %1738 = vmatpush1.msra.mxu0 1.0
        %1739 = vmatprep.subr.mxu0 0.0
        %1740 = vmatpush1.msra.mxu0 1.0
        %1741 = vmatprep.subr.mxu0 0.0
        %1742 = vmatpush1.msra.mxu0 1.0
        %1743 = vmatprep.subr.mxu0 0.0
        %1744 = vmatpush1.msra.mxu0 1.0
        %1745 = vmatprep.subr.mxu0 0.0
        %1746 = vmatpush1.msra.mxu0 1.0
        %1747 = vmatprep.subr.mxu0 0.0
        %1748 = vmatpush1.msra.mxu0 1.0
        %1749 = vmatprep.subr.mxu0 0.0
        %1750 = vmatpush1.msra.mxu0 1.0
        %1751 = vmatprep.subr.mxu0 0.0
        %1752 = vmatpush1.msra.mxu0 1.0
        %1753 = vmatprep.subr.mxu0 0.0
        %1754 = vmatpush1.msra.mxu0 1.0
        %1755 = vmatprep.subr.mxu0 0.0
        %1756 = vmatpush1.msra.mxu0 1.0
        %1757 = vmatprep.subr.mxu0 0.0
        %1758 = vmatpush1.msra.mxu0 1.0
        %1759 = vmatprep.subr.mxu0 0.0
        %1760 = vmatpush1.msra.mxu0 0.0
        %1761 = vmatprep.subr.mxu0 0.0
        %1762 = vmatpush1.msra.mxu0 0.0
        %1763 = vmatprep.subr.mxu0 0.0
        %1764 = vmatpush1.msra.mxu0 0.0
        %1765 = vmatprep.subr.mxu0 0.0
        %1766 = vmatpush1.msra.mxu0 0.0
        %1767 = vmatprep.subr.mxu0 0.0
        %1768 = vmatpush1.msra.mxu0 0.0
        %1769 = vmatprep.subr.mxu0 0.0
        %1770 = vmatpush1.msra.mxu0 0.0
        %1771 = vmatprep.subr.mxu0 0.0
        %1772 = vmatpush1.msra.mxu0 0.0
        %1773 = vmatprep.subr.mxu0 0.0
        %1774 = vmatpush1.msra.mxu0 0.0
        %1775 = vmatprep.subr.mxu0 0.0
        %1776 = vmatpush1.msra.mxu0 0.0
        %1777 = vmatprep.subr.mxu0 0.0
        %1778 = vmatpush1.msra.mxu0 0.0
        %1779 = vmatprep.subr.mxu0 0.0
        %1780 = vmatpush1.msra.mxu0 0.0
        %1781 = vmatprep.subr.mxu0 0.0
        %1782 = vmatpush1.msra.mxu0 0.0
        %1783 = vmatprep.subr.mxu0 0.0
        %1784 = vmatpush1.msra.mxu0 0.0
        %1785 = vmatprep.subr.mxu0 0.0
        %1786 = vmatpush1.msra.mxu0 0.0
        %1787 = vmatprep.subr.mxu0 0.0
        %1788 = vmatpush1.msra.mxu0 0.0
        %1789 = vmatprep.subr.mxu0 0.0
        %1790 = vmatpush1.msra.mxu0 0.0
        %1791 = vmatprep.mubr.f32.mxu0 0.0
        %v1792 = vand.u32 %v1725, 4294901760
        %v1793 = vsub.f32 %v1725, %v1792
        %v1794 = vand.u32 %v1793, 4294901760
        %v1795 = vsub.f32 %v1793, %v1794
        %v1796 = vand.u32 %v1795, 4294901760
        %1797 = vmatmul.mubr.f32.gmra.mrb[0].mxu0 %v1796
        %v1798 = vpop.f32.mrb[0].mxu0
        %v1799 = vadd.f32 0.0, %v1798
        %v1800 = vpop.f32.mrb[0].mxu0
        %1801 = vmatprep.mubr.f32.mxu0 0.0
        %v1802 = vand.u32 %v1726, 4294901760
        %v1803 = vsub.f32 %v1726, %v1802
        %v1804 = vand.u32 %v1803, 4294901760
        %v1805 = vsub.f32 %v1803, %v1804
        %v1806 = vand.u32 %v1805, 4294901760
        %1807 = vmatmul.mubr.f32.gmra.mrb[0].mxu0 %v1806
        %v1808 = vpop.f32.mrb[0].mxu0
        %v1809 = vadd.f32 0.0, %v1808
        %v1810 = vpop.f32.mrb[0].mxu0
        %1811 = vdwg.mxu0
        %1812 = vmatprep.subr.mxu0 0.0
        %1813 = vmatpush1.msra.mxu0 0.0
        %1814 = vmatprep.subr.mxu0 0.0
        %1815 = vmatpush1.msra.mxu0 0.0
        %1816 = vmatprep.subr.mxu0 0.0
        %1817 = vmatpush1.msra.mxu0 0.0
        %1818 = vmatprep.subr.mxu0 0.0
        %1819 = vmatpush1.msra.mxu0 0.0
        %1820 = vmatprep.subr.mxu0 0.0
        %1821 = vmatpush1.msra.mxu0 0.0
        %1822 = vmatprep.subr.mxu0 0.0
        %1823 = vmatpush1.msra.mxu0 0.0
        %1824 = vmatprep.subr.mxu0 0.0
        %1825 = vmatpush1.msra.mxu0 0.0
        %1826 = vmatprep.subr.mxu0 0.0
        %1827 = vmatpush1.msra.mxu0 0.0
        %1828 = vmatprep.subr.mxu0 0.0
        %1829 = vmatpush1.msra.mxu0 0.0
        %1830 = vmatprep.subr.mxu0 0.0
        %1831 = vmatpush1.msra.mxu0 0.0
        %1832 = vmatprep.subr.mxu0 0.0
        %1833 = vmatpush1.msra.mxu0 0.0
        %1834 = vmatprep.subr.mxu0 0.0
        %1835 = vmatpush1.msra.mxu0 0.0
        %1836 = vmatprep.subr.mxu0 0.0
        %1837 = vmatpush1.msra.mxu0 0.0
        %1838 = vmatprep.subr.mxu0 0.0
        %1839 = vmatpush1.msra.mxu0 0.0
        %1840 = vmatprep.subr.mxu0 0.0
        %1841 = vmatpush1.msra.mxu0 0.0
        %1842 = vmatprep.subr.mxu0 0.0
        %1843 = vmatpush1.msra.mxu0 0.0
        %1844 = vmatprep.subr.mxu0 0.0
        %1845 = vmatpush1.msra.mxu0 0.0
        %1846 = vmatprep.subr.mxu0 0.0
        %1847 = vmatpush1.msra.mxu0 0.0
        %1848 = vmatprep.subr.mxu0 0.0
        %1849 = vmatpush1.msra.mxu0 0.0
        %1850 = vmatprep.subr.mxu0 0.0
        %1851 = vmatpush1.msra.mxu0 0.0
        %1852 = vmatprep.subr.mxu0 0.0
        %1853 = vmatpush1.msra.mxu0 0.0
        %1854 = vmatprep.subr.mxu0 0.0
        %1855 = vmatpush1.msra.mxu0 0.0
        %1856 = vmatprep.subr.mxu0 0.0
        %1857 = vmatpush1.msra.mxu0 0.0
        %1858 = vmatprep.subr.mxu0 0.0
        %1859 = vmatpush1.msra.mxu0 0.0
        %1860 = vmatprep.subr.mxu0 0.0
        %1861 = vmatpush1.msra.mxu0 0.0
        %1862 = vmatprep.subr.mxu0 0.0
        %1863 = vmatpush1.msra.mxu0 0.0
        %1864 = vmatprep.subr.mxu0 0.0
        %1865 = vmatpush1.msra.mxu0 0.0
        %1866 = vmatprep.subr.mxu0 0.0
        %1867 = vmatpush1.msra.mxu0 0.0
        %1868 = vmatprep.subr.mxu0 0.0
        %1869 = vmatpush1.msra.mxu0 0.0
        %1870 = vmatprep.subr.mxu0 0.0
        %1871 = vmatpush1.msra.mxu0 0.0
        %1872 = vmatprep.subr.mxu0 0.0
        %1873 = vmatpush1.msra.mxu0 0.0
        %1874 = vmatprep.subr.mxu0 0.0
        %1875 = vmatpush1.msra.mxu0 0.0
        %1876 = vmatprep.mubr.f32.mxu0 0.0
        %v1877 = vand.u32 %v1725, 4294901760
        %1878 = vmatmul.mubr.f32.gmra.mrb[0].mxu0 %v1877
        %v1879 = vpop.f32.mrb[0].mxu0
        %v1880 = vadd.f32 %v1799, %v1879
        %v1881 = vpop.f32.mrb[0].mxu0
        %1882 = vmatprep.mubr.f32.mxu0 0.0
        %v1883 = vand.u32 %v1726, 4294901760
        %1884 = vmatmul.mubr.f32.gmra.mrb[0].mxu0 %v1883
        %v1885 = vpop.f32.mrb[0].mxu0
        %v1886 = vadd.f32 %v1809, %v1885
        %v1887 = vpop.f32.mrb[0].mxu0
        %1888 = vdwg.mxu0
        %1889 = vmatprep.subr.mxu0 0.0
        %1890 = vmatpush1.msra.mxu0 0.0
        %1891 = vmatprep.subr.mxu0 0.0
        %1892 = vmatpush1.msra.mxu0 0.0
        %1893 = vmatprep.subr.mxu0 0.0
        %1894 = vmatpush1.msra.mxu0 0.0
        %1895 = vmatprep.subr.mxu0 0.0
        %1896 = vmatpush1.msra.mxu0 0.0
        %1897 = vmatprep.subr.mxu0 0.0
        %1898 = vmatpush1.msra.mxu0 0.0
        %1899 = vmatprep.subr.mxu0 0.0
        %1900 = vmatpush1.msra.mxu0 0.0
        %1901 = vmatprep.subr.mxu0 0.0
        %1902 = vmatpush1.msra.mxu0 0.0
        %1903 = vmatprep.subr.mxu0 0.0
        %1904 = vmatpush1.msra.mxu0 0.0
        %1905 = vmatprep.subr.mxu0 0.0
        %1906 = vmatpush1.msra.mxu0 0.0
        %1907 = vmatprep.subr.mxu0 0.0
        %1908 = vmatpush1.msra.mxu0 0.0
        %1909 = vmatprep.subr.mxu0 0.0
        %1910 = vmatpush1.msra.mxu0 0.0
        %1911 = vmatprep.subr.mxu0 0.0
        %1912 = vmatpush1.msra.mxu0 0.0
        %1913 = vmatprep.subr.mxu0 0.0
        %1914 = vmatpush1.msra.mxu0 0.0
        %1915 = vmatprep.subr.mxu0 0.0
        %1916 = vmatpush1.msra.mxu0 0.0
        %1917 = vmatprep.subr.mxu0 0.0
        %1918 = vmatpush1.msra.mxu0 0.0
        %1919 = vmatprep.subr.mxu0 0.0
        %1920 = vmatpush1.msra.mxu0 0.0
        %1921 = vmatprep.subr.mxu0 0.0
        %1922 = vmatpush1.msra.mxu0 0.0
        %1923 = vmatprep.subr.mxu0 0.0
        %1924 = vmatpush1.msra.mxu0 0.0
        %1925 = vmatprep.subr.mxu0 0.0
        %1926 = vmatpush1.msra.mxu0 0.0
        %1927 = vmatprep.subr.mxu0 0.0
        %1928 = vmatpush1.msra.mxu0 0.0
        %1929 = vmatprep.subr.mxu0 0.0
        %1930 = vmatpush1.msra.mxu0 0.0
        %1931 = vmatprep.subr.mxu0 0.0
        %1932 = vmatpush1.msra.mxu0 0.0
        %1933 = vmatprep.subr.mxu0 0.0
        %1934 = vmatpush1.msra.mxu0 0.0
        %1935 = vmatprep.subr.mxu0 0.0
        %1936 = vmatpush1.msra.mxu0 0.0
        %1937 = vmatprep.subr.mxu0 0.0
        %1938 = vmatpush1.msra.mxu0 0.0
        %1939 = vmatprep.subr.mxu0 0.0
        %1940 = vmatpush1.msra.mxu0 0.0
        %1941 = vmatprep.subr.mxu0 0.0
        %1942 = vmatpush1.msra.mxu0 0.0
        %1943 = vmatprep.subr.mxu0 0.0
        %1944 = vmatpush1.msra.mxu0 0.0
        %1945 = vmatprep.subr.mxu0 0.0
        %1946 = vmatpush1.msra.mxu0 0.0
        %1947 = vmatprep.subr.mxu0 0.0
        %1948 = vmatpush1.msra.mxu0 0.0
        %1949 = vmatprep.subr.mxu0 0.0
        %1950 = vmatpush1.msra.mxu0 0.0
        %1951 = vmatprep.subr.mxu0 0.0
        %1952 = vmatpush1.msra.mxu0 0.0
        %1953 = vmatprep.mubr.f32.mxu0 0.0
        %v1954 = vand.u32 %v1725, 4294901760
        %v1955 = vsub.f32 %v1725, %v1954
        %1956 = vmatmul.mubr.f32.gmra.mrb[0].mxu0 %v1955
        %v1957 = vpop.f32.mrb[0].mxu0
        %v1958 = vadd.f32 %v1880, %v1957
        %v1959 = vpop.f32.mrb[0].mxu0
        %1960 = vmatprep.mubr.f32.mxu0 0.0
        %v1961 = vand.u32 %v1726, 4294901760
        %v1962 = vsub.f32 %v1726, %v1961
        %1963 = vmatmul.mubr.f32.gmra.mrb[0].mxu0 %v1962
        %v1964 = vpop.f32.mrb[0].mxu0
        %v1965 = vadd.f32 %v1886, %v1964
        %v1966 = vpop.f32.mrb[0].mxu0
        %1967 = vdwg.mxu0
        %1968 = vmatprep.subr.mxu0 0.0
        %1969 = vmatpush1.msra.mxu0 1.0
        %1970 = vmatprep.subr.mxu0 0.0
        %1971 = vmatpush1.msra.mxu0 1.0
        %1972 = vmatprep.subr.mxu0 0.0
        %1973 = vmatpush1.msra.mxu0 1.0
        %1974 = vmatprep.subr.mxu0 0.0
        %1975 = vmatpush1.msra.mxu0 1.0
        %1976 = vmatprep.subr.mxu0 0.0
        %1977 = vmatpush1.msra.mxu0 1.0
        %1978 = vmatprep.subr.mxu0 0.0
        %1979 = vmatpush1.msra.mxu0 1.0
        %1980 = vmatprep.subr.mxu0 0.0
        %1981 = vmatpush1.msra.mxu0 1.0
        %1982 = vmatprep.subr.mxu0 0.0
        %1983 = vmatpush1.msra.mxu0 1.0
        %1984 = vmatprep.subr.mxu0 0.0
        %1985 = vmatpush1.msra.mxu0 1.0
        %1986 = vmatprep.subr.mxu0 0.0
        %1987 = vmatpush1.msra.mxu0 1.0
        %1988 = vmatprep.subr.mxu0 0.0
        %1989 = vmatpush1.msra.mxu0 1.0
        %1990 = vmatprep.subr.mxu0 0.0
        %1991 = vmatpush1.msra.mxu0 1.0
        %1992 = vmatprep.subr.mxu0 0.0
        %1993 = vmatpush1.msra.mxu0 1.0
        %1994 = vmatprep.subr.mxu0 0.0
        %1995 = vmatpush1.msra.mxu0 1.0
        %1996 = vmatprep.subr.mxu0 0.0
        %1997 = vmatpush1.msra.mxu0 1.0
        %1998 = vmatprep.subr.mxu0 0.0
        %1999 = vmatpush1.msra.mxu0 1.0
        %2000 = vmatprep.subr.mxu0 0.0
        %2001 = vmatpush1.msra.mxu0 0.0
        %2002 = vmatprep.subr.mxu0 0.0
        %2003 = vmatpush1.msra.mxu0 0.0
        %2004 = vmatprep.subr.mxu0 0.0
        %2005 = vmatpush1.msra.mxu0 0.0
        %2006 = vmatprep.subr.mxu0 0.0
        %2007 = vmatpush1.msra.mxu0 0.0
        %2008 = vmatprep.subr.mxu0 0.0
        %2009 = vmatpush1.msra.mxu0 0.0
        %2010 = vmatprep.subr.mxu0 0.0
        %2011 = vmatpush1.msra.mxu0 0.0
        %2012 = vmatprep.subr.mxu0 0.0
        %2013 = vmatpush1.msra.mxu0 0.0
        %2014 = vmatprep.subr.mxu0 0.0
        %2015 = vmatpush1.msra.mxu0 0.0
        %2016 = vmatprep.subr.mxu0 0.0
        %2017 = vmatpush1.msra.mxu0 0.0
        %2018 = vmatprep.subr.mxu0 0.0
        %2019 = vmatpush1.msra.mxu0 0.0
        %2020 = vmatprep.subr.mxu0 0.0
        %2021 = vmatpush1.msra.mxu0 0.0
        %2022 = vmatprep.subr.mxu0 0.0
        %2023 = vmatpush1.msra.mxu0 0.0
        %2024 = vmatprep.subr.mxu0 0.0
        %2025 = vmatpush1.msra.mxu0 0.0
        %2026 = vmatprep.subr.mxu0 0.0
        %2027 = vmatpush1.msra.mxu0 0.0
        %2028 = vmatprep.subr.mxu0 0.0
        %2029 = vmatpush1.msra.mxu0 0.0
        %2030 = vmatprep.subr.mxu0 0.0
        %2031 = vmatpush1.msra.mxu0 0.0
        %2032 = vmatprep.mubr.f32.mxu0 0.0
        %v2033 = vand.u32 %v1725, 4294901760
        %v2034 = vsub.f32 %v1725, %v2033
        %v2035 = vand.u32 %v2034, 4294901760
        %2036 = vmatmul.mubr.f32.gmra.mrb[0].mxu0 %v2035
        %v2037 = vpop.f32.mrb[0].mxu0
        %v2038 = vadd.f32 %v1958, %v2037
        %v2039 = vpop.f32.mrb[0].mxu0
        %2040 = vmatprep.mubr.f32.mxu0 0.0
        %v2041 = vand.u32 %v1726, 4294901760
        %v2042 = vsub.f32 %v1726, %v2041
        %v2043 = vand.u32 %v2042, 4294901760
        %2044 = vmatmul.mubr.f32.gmra.mrb[0].mxu0 %v2043
        %v2045 = vpop.f32.mrb[0].mxu0
        %v2046 = vadd.f32 %v1965, %v2045
        %v2047 = vpop.f32.mrb[0].mxu0
        %2048 = vdwg.mxu0
        %2049 = vmatprep.subr.mxu0 0.0
        %2050 = vmatpush1.msra.mxu0 0.0
        %2051 = vmatprep.subr.mxu0 0.0
        %2052 = vmatpush1.msra.mxu0 0.0
        %2053 = vmatprep.subr.mxu0 0.0
        %2054 = vmatpush1.msra.mxu0 0.0
        %2055 = vmatprep.subr.mxu0 0.0
        %2056 = vmatpush1.msra.mxu0 0.0
        %2057 = vmatprep.subr.mxu0 0.0
        %2058 = vmatpush1.msra.mxu0 0.0
        %2059 = vmatprep.subr.mxu0 0.0
        %2060 = vmatpush1.msra.mxu0 0.0
        %2061 = vmatprep.subr.mxu0 0.0
        %2062 = vmatpush1.msra.mxu0 0.0
        %2063 = vmatprep.subr.mxu0 0.0
        %2064 = vmatpush1.msra.mxu0 0.0
        %2065 = vmatprep.subr.mxu0 0.0
        %2066 = vmatpush1.msra.mxu0 0.0
        %2067 = vmatprep.subr.mxu0 0.0
        %2068 = vmatpush1.msra.mxu0 0.0
        %2069 = vmatprep.subr.mxu0 0.0
        %2070 = vmatpush1.msra.mxu0 0.0
        %2071 = vmatprep.subr.mxu0 0.0
        %2072 = vmatpush1.msra.mxu0 0.0
        %2073 = vmatprep.subr.mxu0 0.0
        %2074 = vmatpush1.msra.mxu0 0.0
        %2075 = vmatprep.subr.mxu0 0.0
        %2076 = vmatpush1.msra.mxu0 0.0
        %2077 = vmatprep.subr.mxu0 0.0
        %2078 = vmatpush1.msra.mxu0 0.0
        %2079 = vmatprep.subr.mxu0 0.0
        %2080 = vmatpush1.msra.mxu0 0.0
        %2081 = vmatprep.subr.mxu0 0.0
        %2082 = vmatpush1.msra.mxu0 0.0
        %2083 = vmatprep.subr.mxu0 0.0
        %2084 = vmatpush1.msra.mxu0 0.0
        %2085 = vmatprep.subr.mxu0 0.0
        %2086 = vmatpush1.msra.mxu0 0.0
        %2087 = vmatprep.subr.mxu0 0.0
        %2088 = vmatpush1.msra.mxu0 0.0
        %2089 = vmatprep.subr.mxu0 0.0
        %2090 = vmatpush1.msra.mxu0 0.0
        %2091 = vmatprep.subr.mxu0 0.0
        %2092 = vmatpush1.msra.mxu0 0.0
        %2093 = vmatprep.subr.mxu0 0.0
        %2094 = vmatpush1.msra.mxu0 0.0
        %2095 = vmatprep.subr.mxu0 0.0
        %2096 = vmatpush1.msra.mxu0 0.0
        %2097 = vmatprep.subr.mxu0 0.0
        %2098 = vmatpush1.msra.mxu0 0.0
        %2099 = vmatprep.subr.mxu0 0.0
        %2100 = vmatpush1.msra.mxu0 0.0
        %2101 = vmatprep.subr.mxu0 0.0
        %2102 = vmatpush1.msra.mxu0 0.0
        %2103 = vmatprep.subr.mxu0 0.0
        %2104 = vmatpush1.msra.mxu0 0.0
        %2105 = vmatprep.subr.mxu0 0.0
        %2106 = vmatpush1.msra.mxu0 0.0
        %2107 = vmatprep.subr.mxu0 0.0
        %2108 = vmatpush1.msra.mxu0 0.0
        %2109 = vmatprep.subr.mxu0 0.0
        %2110 = vmatpush1.msra.mxu0 0.0
        %2111 = vmatprep.subr.mxu0 0.0
        %2112 = vmatpush1.msra.mxu0 0.0
        %2113 = vmatprep.mubr.f32.mxu0 0.0
        %v2114 = vand.u32 %v1725, 4294901760
        %2115 = vmatmul.mubr.f32.gmra.mrb[0].mxu0 %v2114
        %v2116 = vpop.f32.mrb[0].mxu0
        %v2117 = vadd.f32 %v2038, %v2116
        %v2118 = vpop.f32.mrb[0].mxu0
        %2119 = vmatprep.mubr.f32.mxu0 0.0
        %v2120 = vand.u32 %v1726, 4294901760
        %2121 = vmatmul.mubr.f32.gmra.mrb[0].mxu0 %v2120
        %v2122 = vpop.f32.mrb[0].mxu0
        %v2123 = vadd.f32 %v2046, %v2122
        %v2124 = vpop.f32.mrb[0].mxu0
        %2125 = vdwg.mxu0
        %2126 = vmatprep.subr.mxu0 0.0
        %2127 = vmatpush1.msra.mxu0 1.0
        %2128 = vmatprep.subr.mxu0 0.0
        %2129 = vmatpush1.msra.mxu0 1.0
        %2130 = vmatprep.subr.mxu0 0.0
        %2131 = vmatpush1.msra.mxu0 1.0
        %2132 = vmatprep.subr.mxu0 0.0
        %2133 = vmatpush1.msra.mxu0 1.0
        %2134 = vmatprep.subr.mxu0 0.0
        %2135 = vmatpush1.msra.mxu0 1.0
        %2136 = vmatprep.subr.mxu0 0.0
        %2137 = vmatpush1.msra.mxu0 1.0
        %2138 = vmatprep.subr.mxu0 0.0
        %2139 = vmatpush1.msra.mxu0 1.0
        %2140 = vmatprep.subr.mxu0 0.0
        %2141 = vmatpush1.msra.mxu0 1.0
        %2142 = vmatprep.subr.mxu0 0.0
        %2143 = vmatpush1.msra.mxu0 1.0
        %2144 = vmatprep.subr.mxu0 0.0
        %2145 = vmatpush1.msra.mxu0 1.0
        %2146 = vmatprep.subr.mxu0 0.0
        %2147 = vmatpush1.msra.mxu0 1.0
        %2148 = vmatprep.subr.mxu0 0.0
        %2149 = vmatpush1.msra.mxu0 1.0
        %2150 = vmatprep.subr.mxu0 0.0
        %2151 = vmatpush1.msra.mxu0 1.0
        %2152 = vmatprep.subr.mxu0 0.0
        %2153 = vmatpush1.msra.mxu0 1.0
        %2154 = vmatprep.subr.mxu0 0.0
        %2155 = vmatpush1.msra.mxu0 1.0
        %2156 = vmatprep.subr.mxu0 0.0
        %2157 = vmatpush1.msra.mxu0 1.0
        %2158 = vmatprep.subr.mxu0 0.0
        %2159 = vmatpush1.msra.mxu0 0.0
        %2160 = vmatprep.subr.mxu0 0.0
        %2161 = vmatpush1.msra.mxu0 0.0
        %2162 = vmatprep.subr.mxu0 0.0
        %2163 = vmatpush1.msra.mxu0 0.0
        %2164 = vmatprep.subr.mxu0 0.0
        %2165 = vmatpush1.msra.mxu0 0.0
        %2166 = vmatprep.subr.mxu0 0.0
        %2167 = vmatpush1.msra.mxu0 0.0
        %2168 = vmatprep.subr.mxu0 0.0
        %2169 = vmatpush1.msra.mxu0 0.0
        %2170 = vmatprep.subr.mxu0 0.0
        %2171 = vmatpush1.msra.mxu0 0.0
        %2172 = vmatprep.subr.mxu0 0.0
        %2173 = vmatpush1.msra.mxu0 0.0
        %2174 = vmatprep.subr.mxu0 0.0
        %2175 = vmatpush1.msra.mxu0 0.0
        %2176 = vmatprep.subr.mxu0 0.0
        %2177 = vmatpush1.msra.mxu0 0.0
        %2178 = vmatprep.subr.mxu0 0.0
        %2179 = vmatpush1.msra.mxu0 0.0
        %2180 = vmatprep.subr.mxu0 0.0
        %2181 = vmatpush1.msra.mxu0 0.0
        %2182 = vmatprep.subr.mxu0 0.0
        %2183 = vmatpush1.msra.mxu0 0.0
        %2184 = vmatprep.subr.mxu0 0.0
        %2185 = vmatpush1.msra.mxu0 0.0
        %2186 = vmatprep.subr.mxu0 0.0
        %2187 = vmatpush1.msra.mxu0 0.0
        %2188 = vmatprep.subr.mxu0 0.0
        %2189 = vmatpush1.msra.mxu0 0.0
        %2190 = vmatprep.mubr.f32.mxu0 0.0
        %v2191 = vand.u32 %v1725, 4294901760
        %2192 = vmatmul.mubr.f32.gmra.mrb[0].mxu0 %v2191
        %v2193 = vpop.f32.mrb[0].mxu0
        %v2194 = vadd.f32 %v2117, %v2193
        %v2195 = vpop.f32.mrb[0].mxu0
        %2196 = vmatprep.mubr.f32.mxu0 0.0
        %v2197 = vand.u32 %v1726, 4294901760
        %2198 = vmatmul.mubr.f32.gmra.mrb[0].mxu0 %v2197
        %v2199 = vpop.f32.mrb[0].mxu0
        %v2200 = vadd.f32 %v2123, %v2199
        %v2201 = vpop.f32.mrb[0].mxu0
        %2202 = vdwg.mxu0
        %v2203 = vld [vmem:[#allocation2] sm:$0x1]
        %v2204 = vsub.f32 %v1713, %v752
        %v2205 = vsub.f32 %v1719, %v758
        %v2206 = vadd.f32 %v2204, 1e-06
        %v2207 = vadd.f32 %v2205, 1e-06
        %v2208 = vmul.f32 %v2206, %v2206
        %v2209 = vmul.f32 %v2207, %v2207
        %v2210 = vadd.f32 %v2208, %v2209
        %v2211 = vrot.slane %v2210, 4
        %v2212 = vadd.f32 %v2210, %v2211
        %v2213 = vrot.slane %v2212, 2
        %v2214 = vadd.f32 %v2212, %v2213
        %v2215 = vrot.slane %v2214, 1
        %v2216 = vadd.f32 %v2214, %v2215
        %v2217 = vadd.f32 %v2203, %v2216
        %2218 = vst [vmem:[#allocation2] sm:$0x1] %v2217
        %v2219 = vld [vmem:[#allocation3] sm:$0x1]
        %v2220 = vsub.f32 %v2194, %v1233
        %v2221 = vsub.f32 %v2200, %v1239
        %v2222 = vadd.f32 %v2220, 1e-06
        %v2223 = vadd.f32 %v2221, 1e-06
        %v2224 = vmul.f32 %v2222, %v2222
        %v2225 = vmul.f32 %v2223, %v2223
        %v2226 = vadd.f32 %v2224, %v2225
        %v2227 = vrot.slane %v2226, 4
        %v2228 = vadd.f32 %v2226, %v2227
        %v2229 = vrot.slane %v2228, 2
        %v2230 = vadd.f32 %v2228, %v2229
        %v2231 = vrot.slane %v2230, 1
        %v2232 = vadd.f32 %v2230, %v2231
        %v2233 = vadd.f32 %v2219, %v2232
        %2234 = vst [vmem:[#allocation3] sm:$0x1] %v2233
        %v2235 = vld [vmem:[#allocation4] sm:$0x1]
        %v2236 = vsub.f32 %v1233, %v752
        %v2237 = vsub.f32 %v1239, %v758
        %v2238 = vadd.f32 %v2236, 1e-06
        %v2239 = vadd.f32 %v2237, 1e-06
        %v2240 = vmul.f32 %v2238, %v2238
        %v2241 = vmul.f32 %v2239, %v2239
        %v2242 = vadd.f32 %v2240, %v2241
        %v2243 = vrot.slane %v2242, 4
        %v2244 = vadd.f32 %v2242, %v2243
        %v2245 = vrot.slane %v2244, 2
        %v2246 = vadd.f32 %v2244, %v2245
        %v2247 = vrot.slane %v2246, 1
        %v2248 = vadd.f32 %v2246, %v2247
        %v2249 = vadd.f32 %v2235, %v2248
        %2250 = vst [vmem:[#allocation4] sm:$0x1] %v2249
        %v2251 = vld [vmem:[#allocation5] sm:$0x1]
        %v2252 = vsub.f32 %v2194, %v1713
        %v2253 = vsub.f32 %v2200, %v1719
        %v2254 = vadd.f32 %v2252, 1e-06
        %v2255 = vadd.f32 %v2253, 1e-06
        %v2256 = vmul.f32 %v2254, %v2254
        %v2257 = vmul.f32 %v2255, %v2255
        %v2258 = vadd.f32 %v2256, %v2257
        %v2259 = vrot.slane %v2258, 4
        %v2260 = vadd.f32 %v2258, %v2259
        %v2261 = vrot.slane %v2260, 2
        %v2262 = vadd.f32 %v2260, %v2261
        %v2263 = vrot.slane %v2262, 1
        %v2264 = vadd.f32 %v2262, %v2263
        %v2265 = vadd.f32 %v2251, %v2264
        %2266 = vst [vmem:[#allocation5] sm:$0x1] %v2265
        // Predicated region
        $region41: #{tpu_custom_call.1} parent=27 // pred_check
          %p2267 = pneg %p273
        $region42: #{tpu_custom_call.1} parent=27 // pred_check_branch
          %2269 = sbr.rel (%p2267) target = $region44
        $region43: #{tpu_custom_call.1} parent=27 // pred_region
          %v2270 = vld [vmem:[#allocation2] sm:$0x1]
          %vm2271 = vcmask 0
          %2272 = vst.msk [vmem:[%s270] sm:$0x1] %vm2271, %v2270
          %v2273 = vld [vmem:[#allocation3] sm:$0x1]
          %v2275 = vlaneseq
          %v2276 = vshrl.u32 %v2275, 7
          %v2277 = vsub.s32 0, %v2276
          %v2278 = vrot.slane %v2273, %v2277
          %2279 = vrot.lane.b32.xlu0 %v2278, 1
          %v2280 = vpop.permute.xlu0 %2279
          %vm2282 = vcmask 8200
          %2283 = vst.msk [vmem:[%s270] sm:$0x1] %vm2282, %v2280
          %v2284 = vld [vmem:[#allocation4] sm:$0x1]
          %v2286 = vlaneseq
          %v2287 = vshrl.u32 %v2286, 7
          %v2288 = vsub.s32 0, %v2287
          %v2289 = vrot.slane %v2284, %v2288
          %2290 = vrot.lane.b32.xlu0 %v2289, 2
          %v2291 = vpop.permute.xlu0 %2290
          %vm2293 = vcmask 16400
          %2294 = vst.msk [vmem:[%s270] sm:$0x1] %vm2293, %v2291
          %v2295 = vld [vmem:[#allocation5] sm:$0x1]
          %v2297 = vlaneseq
          %v2298 = vshrl.u32 %v2297, 7
          %v2299 = vsub.s32 0, %v2298
          %v2300 = vrot.slane %v2295, %v2299
          %2301 = vrot.lane.b32.xlu0 %v2300, 3
          %v2302 = vpop.permute.xlu0 %2301
          %vm2304 = vcmask 24600
          %2305 = vst.msk [vmem:[%s270] sm:$0x1] %vm2304, %v2302
        $region44: #{tpu_custom_call.1} parent=27 // pred_fallthru
          _
        %s2306 = sand.u32 %s98, 1
        %s2307 = scalar_lea.sflag [#allocation8], %s2306
        %s2308 = sand.u32 %s98, 1
        %s2309 = scalar_lea.vmem [#allocation11], %s2308
        // Predicated region
        $region45: #{tpu_custom_call.1} parent=27 // pred_check
          %p2310 = pneg %p108
        $region46: #{tpu_custom_call.1} parent=27 // pred_check_branch
          %2312 = sbr.rel (%p2310) target = $region48
        $region47: #{tpu_custom_call.1} parent=27 // pred_region
          %s2314 = ssub.s32 16, 16
          %2315 = vsyncadd %s2307, %s2314
          %s2316 = smul.addr %s26, 16
          %s2317 = scalar_lea.hbm %s2, %s2316
          %s2319 = sshll.u32 %s2309, 4
          %s2320 = int_to_ptr.vmem [resolvable:$true] %s2319
          %2322 = dma.vmem_to_hbm [thread:$0]  %s2320, 16, %s2317, %s2307
        $region48: #{tpu_custom_call.1} parent=27 // pred_fallthru
          _
      $region28: #{tpu_custom_call.1} parent=5 // pred_fallthru
        _
      %p2323 = scmp.le.s32.totalorder 2, %s17
      // Predicated region
      $region49: #{tpu_custom_call.1} parent=5 // pred_check
        %p2324 = pneg %p2323
      $region50: #{tpu_custom_call.1} parent=5 // pred_check_branch
        %2326 = sbr.rel (%p2324) target = $region52
      $region51: #{tpu_custom_call.1} parent=5 // pred_region
        %s2327 = ssub.s32 %s17, 2
        // Predicated region
        $region53: #{tpu_custom_call.1} parent=51 // pred_check
          %p2328 = pneg %p114
        $region54: #{tpu_custom_call.1} parent=51 // pred_check_branch
          %2330 = sbr.rel (%p2328) target = $region56
        $region55: #{tpu_custom_call.1} parent=51 // pred_region
          %s2331 = sand.u32 %s99, 1
          %s2332 = scalar_lea.sflag [#allocation8], %s2331
          %s2333 = sand.u32 %s99, 1
          %s2334 = scalar_lea.vmem [#allocation11], %s2333
          %2335 = dma.done %s2332, 16
        $region56: #{tpu_custom_call.1} parent=51 // pred_fallthru
          _
      $region52: #{tpu_custom_call.1} parent=5 // pred_fallthru
        _
    $region6: #{tpu_custom_call.1} parent=1 // loop_footer
      %s21 = sadd.s32 1, %s17
    $region7: #{tpu_custom_call.1} parent=1 // loop_footer_branch
      %16 = sbr.rel target = $region3
    $region8: #{tpu_custom_call.1} parent=1 // loop_exit
      _
    %2336 = vsyncpa [#allocation7], 1
    %s2337 = scalar_lea.sflag [#allocation7], 1
    %2338 = vsyncpa %s2337, 1
    %2339 = vsyncpa [#allocation10], 1
    %s2340 = scalar_lea.sflag [#allocation10], 1
    %2341 = vsyncpa %s2340, 1
    %2342 = vsyncpa [#allocation8], 1
    %s2343 = scalar_lea.sflag [#allocation8], 1
    %2344 = vsyncpa %s2343, 1

</llo_original>
